<compile_context>
chip_gen: v5e
topology: v5e:2x2
jax: 0.10.0
libtpu: 0.0.40
codegen_flags: <defaults>
</compile_context>

<pallas_src>
import functools

import jax
import jax.numpy as jnp
from jax import lax
from jax.experimental import pallas as pl
from jax.experimental.pallas import tpu as pltpu

GAMMA = 2.0     # module default
_LANE = 128     # TPU lane width
_SUBLANE = 8    # TPU sublane width


def _round_up(x: int, m: int) -> int:
    return (x + m - 1) // m * m


def _device_kind() -> str:
    try:
        return (getattr(jax.devices()[0], "device_kind", "") or "").lower()
    except Exception:
        return ""


def _vmem_budget_bytes() -> int:
    """Generation-aware VMEM budget for the (double-buffered) working set."""
    kind = _device_kind()
    if "v5" in kind:          # v5e scoped-VMEM default is 16 MiB
        return 12 * 1024 * 1024
    return 22 * 1024 * 1024   # v6e / v7x scoped-VMEM default is 32 MiB


def _cores_per_device() -> int:
    """Best-effort TensorCore count per device (2 on v7x / megacore parts)."""
    try:
        dev = jax.devices()[0]
        for attr in ("num_cores", "core_count"):
            v = getattr(dev, attr, None)
            if isinstance(v, int) and v > 0:
                return v
        kind = (getattr(dev, "device_kind", "") or "").lower()
        if "v7" in kind or "7x" in kind or "v4" in kind or "v5p" in kind:
            return 2
    except Exception:
        pass
    return 1


def _choose_tile_n(n_rows: int, n_classes: int, in_itemsize: int) -> int:
    """Pick the row-block size (multiple of 8 rows) from a VMEM budget."""
    c_pad = _round_up(max(n_classes, 1), _LANE)   # VMEM pads the lane dim to 128
    # Per-row footprint: double-buffered input tile (in its dtype) plus ~4
    # full-lane-width f32 intermediates (x upcast, shifted, exp, select) plus
    # small per-row stats / target / output columns.
    bytes_per_row = 2 * c_pad * max(in_itemsize, 1) + 16 * c_pad + 64
    t = _vmem_budget_bytes() // max(bytes_per_row, 1)
    t = int(max(_SUBLANE, min(t, 4096)))
    if t >= _LANE:
        t -= t % _LANE
    else:
        t -= t % _SUBLANE
    # Never bigger than the sublane-padded problem (ragged last block is fine).
    t = min(t, _round_up(max(n_rows, 1), _SUBLANE))
    # Only split the row axis when the chip actually has >1 TensorCore to feed
    # (v7x / megacore); on v5e/v6e a split just adds a ~0.35 us grid step.
    if _cores_per_device() >= 2 and n_rows >= 2 * _SUBLANE:
        t = min(t, _round_up((n_rows + 1) // 2, _SUBLANE))
    return max(_SUBLANE, t)


def _focal_loss_kernel(x_ref, t_ref, o_ref, *, gamma: float):
    # x_ref: (TN, C) logits; t_ref: (TN, 1) int32 targets; o_ref: (TN, 1) loss.
    x = x_ref[...].astype(jnp.float32)                                 # (TN, C)
    t = t_ref[...]                                                     # (TN, 1)

    # Gather the target column from the *unshifted* logits (one-hot mask; no
    # dynamic gather on TPU).  NOTE: an out-of-range target gathers 0
    # (PyTorch's nll_loss would error); callers should validate targets.
    col = lax.broadcasted_iota(jnp.int32, x.shape, 1)                  # (TN, C)
    x_t = jnp.sum(jnp.where(col == t, x, 0.0), axis=-1, keepdims=True)  # (TN, 1)

    # log-softmax statistics: the only full-class-width transcendental work.
    m = jnp.max(x, axis=-1, keepdims=True)                             # (TN, 1)
    lse = jnp.log(jnp.sum(jnp.exp(x - m), axis=-1, keepdims=True))     # (TN, 1)

    lp_t = (x_t - m) - lse                                             # log_prob[target]
    p_t = jnp.exp(lp_t)                                                # prob[target]
    one_minus = 1.0 - p_t
    if gamma == 2.0:
        w = one_minus * one_minus        # explicit square: one VPU op, no pow
    else:
        w = one_minus ** gamma
    o_ref[...] = -(w * lp_t)                                           # (TN, 1)


def focal_loss(logits: jax.Array, targets: jax.Array, *,
               gamma: float = GAMMA, reduction: str = "none",
               tile_n: int | None = None) -> jax.Array:
    """logits: (N, C) float (f32 or bf16); targets: (N,) int. Per-sample loss."""
    N, C = logits.shape
    if tile_n is None:
        tile_n = _choose_tile_n(N, C, jnp.dtype(logits.dtype).itemsize)
    else:
        # Guard the (8, 128) BlockSpec divisibility rule on the sublane dim.
        tile_n = max(_SUBLANE, tile_n - tile_n % _SUBLANE)
    num_tiles = pl.cdiv(N, tile_n)

    t2d = targets.astype(jnp.int32).reshape(N, 1)

    cost = pl.CostEstimate(
        flops=6 * N * C,
        transcendentals=N * (C + 2),
        bytes_accessed=N * C * jnp.dtype(logits.dtype).itemsize + 8 * N,
    )

    out = pl.pallas_call(
        functools.partial(_focal_loss_kernel, gamma=gamma),
        out_shape=jax.ShapeDtypeStruct((N, 1), jnp.float32),
        grid=(num_tiles,),
        in_specs=[
            pl.BlockSpec((tile_n, C), lambda i: (i, 0)),
            pl.BlockSpec((tile_n, 1), lambda i: (i, 0)),
        ],
        out_specs=pl.BlockSpec((tile_n, 1), lambda i: (i, 0)),
        compiler_params=pltpu.CompilerParams(dimension_semantics=("parallel",)),
        cost_estimate=cost,
    )(logits, t2d)

    loss = out.reshape(N)
    if reduction == "mean":
        return jnp.mean(loss)
    if reduction == "sum":
        return jnp.sum(loss)
    return loss


def _reference(logits, targets, gamma=GAMMA):
    log_prob = jax.nn.log_softmax(logits.astype(jnp.float32), axis=-1)
    prob = jnp.exp(log_prob)
    focal = (1.0 - prob) ** gamma * log_prob
    return -jnp.take_along_axis(focal, targets[:, None].astype(jnp.int32), axis=-1)[:, 0]


if __name__ == "__main__":
    key = jax.random.PRNGKey(0)
    k1, k2 = jax.random.split(key)
    # Small, module-consistent shapes: 500 samples (exercises a ragged last
    # block with no wrapper-side padding), 32 classes on the lane axis.
    N, C = 500, 32
    logits = jax.random.normal(k1, (N, C), dtype=jnp.float32)
    targets = jax.random.randint(k2, (N,), 0, C, dtype=jnp.int32)

    loss = focal_loss(logits, targets)
    jax.block_until_ready(loss)

    ref = _reference(logits, targets)
    assert loss.shape == (N,), loss.shape
    assert jnp.allclose(loss, ref, atol=1e-5, rtol=1e-5), (loss, ref)
    print("KERNEL_OK")
</pallas_src>

<mosaic_0001>
module attributes {stable_mosaic.version = 11 : i64} {
  func.func @_focal_loss_kernel(%arg0: i32, %arg1: memref<504x32xf32, #tpu.memory_space<vmem>>, %arg2: memref<504x1xi32, #tpu.memory_space<vmem>>, %arg3: memref<504x1xf32, #tpu.memory_space<vmem>>) attributes {dimension_semantics = [#tpu.dimension_semantics<parallel>], iteration_bounds = array<i64: 1>, scalar_prefetch = 0 : i64, scratch_operands = 0 : i64, tpu.core_type = #tpu.core_type<tc>, window_params = [{transform_indices = @transform_0, window_bounds = array<i64: 504, 32>}, {transform_indices = @transform_1, window_bounds = array<i64: 504, 1>}, {transform_indices = @transform_2, window_bounds = array<i64: 504, 1>}]} {
    %c0 = arith.constant 0 : index
    %c0_0 = arith.constant 0 : index
    %0 = vector.load %arg1[%c0, %c0_0] : memref<504x32xf32, #tpu.memory_space<vmem>>, vector<504x32xf32>
    %c0_1 = arith.constant 0 : index
    %c0_2 = arith.constant 0 : index
    %1 = vector.load %arg2[%c0_1, %c0_2] : memref<504x1xi32, #tpu.memory_space<vmem>>, vector<504x1xi32>
    %2 = tpu.iota {dimensions = array<i32: 1>} : vector<504x32xi32>
    %3 = vector.broadcast %1 : vector<504x1xi32> to vector<504x32xi32>
    %4 = arith.cmpi eq, %2, %3 : vector<504x32xi32>
    %cst = arith.constant 0.000000e+00 : f32
    %5 = vector.broadcast %cst : f32 to vector<504x32xf32>
    %6 = arith.select %4, %0, %5 : vector<504x32xi1>, vector<504x32xf32>
    %cst_3 = arith.constant dense<0.000000e+00> : vector<504xf32>
    %7 = vector.multi_reduction <add>, %6, %cst_3 [1] : vector<504x32xf32> to vector<504xf32>
    %8 = vector.shape_cast %7 : vector<504xf32> to vector<504x1xf32>
    %cst_4 = arith.constant dense<0xFF800000> : vector<504xf32>
    %9 = vector.multi_reduction <maximumf>, %0, %cst_4 [1] : vector<504x32xf32> to vector<504xf32>
    %10 = vector.shape_cast %9 : vector<504xf32> to vector<504x1xf32>
    %11 = vector.broadcast %10 : vector<504x1xf32> to vector<504x32xf32>
    %12 = arith.subf %0, %11 : vector<504x32xf32>
    %13 = math.exp %12 : vector<504x32xf32>
    %cst_5 = arith.constant dense<0.000000e+00> : vector<504xf32>
    %14 = vector.multi_reduction <add>, %13, %cst_5 [1] : vector<504x32xf32> to vector<504xf32>
    %15 = vector.shape_cast %14 : vector<504xf32> to vector<504x1xf32>
    %16 = math.log %15 : vector<504x1xf32>
    %17 = arith.subf %8, %10 : vector<504x1xf32>
    %18 = arith.subf %17, %16 : vector<504x1xf32>
    %19 = math.exp %18 : vector<504x1xf32>
    %cst_6 = arith.constant 1.000000e+00 : f32
    %20 = vector.broadcast %cst_6 : f32 to vector<504x1xf32>
    %21 = arith.subf %20, %19 : vector<504x1xf32>
    %22 = arith.mulf %21, %21 : vector<504x1xf32>
    %23 = arith.mulf %22, %18 : vector<504x1xf32>
    %cst_7 = arith.constant 0.000000e+00 : f32
    %24 = vector.broadcast %cst_7 : f32 to vector<504x1xf32>
    %25 = arith.subf %24, %23 : vector<504x1xf32>
    %c0_8 = arith.constant 0 : index
    %c0_9 = arith.constant 0 : index
    %26 = vector.load %arg3[%c0_8, %c0_9] : memref<504x1xf32, #tpu.memory_space<vmem>>, vector<504x1xf32>
    tpu.vector_store %arg3[%c0_8, %c0_9], %25 {strides = array<i32>} : memref<504x1xf32, #tpu.memory_space<vmem>>, vector<504x1xf32>,
    return
  }
  func.func @transform_0(%arg0: i32) -> (i32, i32) {
    %c0_i32 = arith.constant 0 : i32
    %c0_i32_0 = arith.constant 0 : i32
    return %arg0, %c0_i32 : i32, i32
  }
  func.func @transform_1(%arg0: i32) -> (i32, i32) {
    %c0_i32 = arith.constant 0 : i32
    %c0_i32_0 = arith.constant 0 : i32
    return %arg0, %c0_i32 : i32, i32
  }
  func.func @transform_2(%arg0: i32) -> (i32, i32) {
    %c0_i32 = arith.constant 0 : i32
    %c0_i32_0 = arith.constant 0 : i32
    return %arg0, %c0_i32 : i32, i32
  }
}

</mosaic_0001>

<llo_original>
// kernel: tpu_custom_call.1
$region0: #{tpu_custom_call.1}
  #allocation0 [shape = 'u32[]', space=smem, size = 0x4, offset = 0x4, fixed_abs, tag = 'smem constant byte address 0x4 - core index']
  #allocation1 [shape = 'u32[72,128]{1,0:T(1,128)}', space=vmem, size = 0x9000, scoped, tag = 'internal scratch']
  %s0 = inlined_call_operand.vmem [shape: f32[500,32], index: 0, kind: input, shape index: {}]
  %s1 = inlined_call_operand.vmem [shape: s32[500,1], index: 1, kind: input, shape index: {}]
  %s2 = inlined_call_operand.vmem [shape: f32[500,1], index: 2, kind: output, shape index: {}]
  %s3 = sld [smem:[#allocation0]]
  $region18: #{tpu_custom_call.1} parent=0
    _
  %s5 = ssub.s32 1, %s3
  %s6 = scalar_select 0, %s5, %s3
  // Predicated region
  $region2: #{tpu_custom_call.1} parent=0 // pred_check
    _
  $region3: #{tpu_custom_call.1} parent=0 // pred_check_branch
    %8 = sbr.rel (0) target = $region5
  $region4: #{tpu_custom_call.1} parent=0 // pred_region
    _
  $region5: #{tpu_custom_call.1} parent=0 // pred_fallthru
    _
  // Predicated region
  $region6: #{tpu_custom_call.1} parent=0 // pred_check
    _
  $region7: #{tpu_custom_call.1} parent=0 // pred_check_branch
    %10 = sbr.rel (0) target = $region9
  $region8: #{tpu_custom_call.1} parent=0 // pred_region
    _
  $region9: #{tpu_custom_call.1} parent=0 // pred_fallthru
    _
  %v11 = vld [vmem:[%s0] sm:$0xff]
  %v12 = vld [vmem:[%s0 + $0x8] sm:$0xff]
  %v13 = vld [vmem:[%s0 + $0x10] sm:$0xff]
  %v14 = vld [vmem:[%s0 + $0x18] sm:$0xff]
  %v15 = vld [vmem:[%s0 + $0x20] sm:$0xff]
  %v16 = vld [vmem:[%s0 + $0x28] sm:$0xff]
  %v17 = vld [vmem:[%s0 + $0x30] sm:$0xff]
  %v18 = vld [vmem:[%s0 + $0x38] sm:$0xff]
  %v19 = vld [vmem:[%s0 + $0x40] sm:$0xff]
  %v20 = vld [vmem:[%s0 + $0x48] sm:$0xff]
  %v21 = vld [vmem:[%s0 + $0x50] sm:$0xff]
  %v22 = vld [vmem:[%s0 + $0x58] sm:$0xff]
  %v23 = vld [vmem:[%s0 + $0x60] sm:$0xff]
  %v24 = vld [vmem:[%s0 + $0x68] sm:$0xff]
  %v25 = vld [vmem:[%s0 + $0x70] sm:$0xff]
  %v26 = vld [vmem:[%s0 + $0x78] sm:$0xff]
  %v27 = vld [vmem:[%s0 + $0x80] sm:$0xff]
  %v28 = vld [vmem:[%s0 + $0x88] sm:$0xff]
  %v29 = vld [vmem:[%s0 + $0x90] sm:$0xff]
  %v30 = vld [vmem:[%s0 + $0x98] sm:$0xff]
  %v31 = vld [vmem:[%s0 + $0xa0] sm:$0xff]
  %v32 = vld [vmem:[%s0 + $0xa8] sm:$0xff]
  %v33 = vld [vmem:[%s0 + $0xb0] sm:$0xff]
  %v34 = vld [vmem:[%s0 + $0xb8] sm:$0xff]
  %v35 = vld [vmem:[%s0 + $0xc0] sm:$0xff]
  %v36 = vld [vmem:[%s0 + $0xc8] sm:$0xff]
  %v37 = vld [vmem:[%s0 + $0xd0] sm:$0xff]
  %v38 = vld [vmem:[%s0 + $0xd8] sm:$0xff]
  %v39 = vld [vmem:[%s0 + $0xe0] sm:$0xff]
  %v40 = vld [vmem:[%s0 + $0xe8] sm:$0xff]
  %v41 = vld [vmem:[%s0 + $0xf0] sm:$0xff]
  %v42 = vld [vmem:[%s0 + $0xf8] sm:$0xff]
  %v43 = vld [vmem:[%s0 + $0x100] sm:$0xff]
  %v44 = vld [vmem:[%s0 + $0x108] sm:$0xff]
  %v45 = vld [vmem:[%s0 + $0x110] sm:$0xff]
  %v46 = vld [vmem:[%s0 + $0x118] sm:$0xff]
  %v47 = vld [vmem:[%s0 + $0x120] sm:$0xff]
  %v48 = vld [vmem:[%s0 + $0x128] sm:$0xff]
  %v49 = vld [vmem:[%s0 + $0x130] sm:$0xff]
  %v50 = vld [vmem:[%s0 + $0x138] sm:$0xff]
  %v51 = vld [vmem:[%s0 + $0x140] sm:$0xff]
  %v52 = vld [vmem:[%s0 + $0x148] sm:$0xff]
  %v53 = vld [vmem:[%s0 + $0x150] sm:$0xff]
  %v54 = vld [vmem:[%s0 + $0x158] sm:$0xff]
  %v55 = vld [vmem:[%s0 + $0x160] sm:$0xff]
  %v56 = vld [vmem:[%s0 + $0x168] sm:$0xff]
  %v57 = vld [vmem:[%s0 + $0x170] sm:$0xff]
  %v58 = vld [vmem:[%s0 + $0x178] sm:$0xff]
  %v59 = vld [vmem:[%s0 + $0x180] sm:$0xff]
  %v60 = vld [vmem:[%s0 + $0x188] sm:$0xff]
  %v61 = vld [vmem:[%s0 + $0x190] sm:$0xff]
  %v62 = vld [vmem:[%s0 + $0x198] sm:$0xff]
  %v63 = vld [vmem:[%s0 + $0x1a0] sm:$0xff]
  %v64 = vld [vmem:[%s0 + $0x1a8] sm:$0xff]
  %v65 = vld [vmem:[%s0 + $0x1b0] sm:$0xff]
  %v66 = vld [vmem:[%s0 + $0x1b8] sm:$0xff]
  %v67 = vld [vmem:[%s0 + $0x1c0] sm:$0xff]
  %v68 = vld [vmem:[%s0 + $0x1c8] sm:$0xff]
  %v69 = vld [vmem:[%s0 + $0x1d0] sm:$0xff]
  %v70 = vld [vmem:[%s0 + $0x1d8] sm:$0xff]
  %v71 = vld [vmem:[%s0 + $0x1e0] sm:$0xff]
  %v72 = vld [vmem:[%s0 + $0x1e8] sm:$0xff]
  %v73 = vld [vmem:[%s0 + $0x1f0] sm:$0xff]
  %v74 = vld [vmem:[%s1] sm:$0xff]
  %v75 = vld [vmem:[%s1 + $0x8] sm:$0xff]
  %v76 = vld [vmem:[%s1 + $0x10] sm:$0xff]
  %v77 = vld [vmem:[%s1 + $0x18] sm:$0xff]
  %v78 = vld [vmem:[%s1 + $0x20] sm:$0xff]
  %v79 = vld [vmem:[%s1 + $0x28] sm:$0xff]
  %v80 = vld [vmem:[%s1 + $0x30] sm:$0xff]
  %v81 = vld [vmem:[%s1 + $0x38] sm:$0xff]
  %v82 = vld [vmem:[%s1 + $0x40] sm:$0xff]
  %v83 = vld [vmem:[%s1 + $0x48] sm:$0xff]
  %v84 = vld [vmem:[%s1 + $0x50] sm:$0xff]
  %v85 = vld [vmem:[%s1 + $0x58] sm:$0xff]
  %v86 = vld [vmem:[%s1 + $0x60] sm:$0xff]
  %v87 = vld [vmem:[%s1 + $0x68] sm:$0xff]
  %v88 = vld [vmem:[%s1 + $0x70] sm:$0xff]
  %v89 = vld [vmem:[%s1 + $0x78] sm:$0xff]
  %v90 = vld [vmem:[%s1 + $0x80] sm:$0xff]
  %v91 = vld [vmem:[%s1 + $0x88] sm:$0xff]
  %v92 = vld [vmem:[%s1 + $0x90] sm:$0xff]
  %v93 = vld [vmem:[%s1 + $0x98] sm:$0xff]
  %v94 = vld [vmem:[%s1 + $0xa0] sm:$0xff]
  %v95 = vld [vmem:[%s1 + $0xa8] sm:$0xff]
  %v96 = vld [vmem:[%s1 + $0xb0] sm:$0xff]
  %v97 = vld [vmem:[%s1 + $0xb8] sm:$0xff]
  %v98 = vld [vmem:[%s1 + $0xc0] sm:$0xff]
  %v99 = vld [vmem:[%s1 + $0xc8] sm:$0xff]
  %v100 = vld [vmem:[%s1 + $0xd0] sm:$0xff]
  %v101 = vld [vmem:[%s1 + $0xd8] sm:$0xff]
  %v102 = vld [vmem:[%s1 + $0xe0] sm:$0xff]
  %v103 = vld [vmem:[%s1 + $0xe8] sm:$0xff]
  %v104 = vld [vmem:[%s1 + $0xf0] sm:$0xff]
  %v105 = vld [vmem:[%s1 + $0xf8] sm:$0xff]
  %v106 = vld [vmem:[%s1 + $0x100] sm:$0xff]
  %v107 = vld [vmem:[%s1 + $0x108] sm:$0xff]
  %v108 = vld [vmem:[%s1 + $0x110] sm:$0xff]
  %v109 = vld [vmem:[%s1 + $0x118] sm:$0xff]
  %v110 = vld [vmem:[%s1 + $0x120] sm:$0xff]
  %v111 = vld [vmem:[%s1 + $0x128] sm:$0xff]
  %v112 = vld [vmem:[%s1 + $0x130] sm:$0xff]
  %v113 = vld [vmem:[%s1 + $0x138] sm:$0xff]
  %v114 = vld [vmem:[%s1 + $0x140] sm:$0xff]
  %v115 = vld [vmem:[%s1 + $0x148] sm:$0xff]
  %v116 = vld [vmem:[%s1 + $0x150] sm:$0xff]
  %v117 = vld [vmem:[%s1 + $0x158] sm:$0xff]
  %v118 = vld [vmem:[%s1 + $0x160] sm:$0xff]
  %v119 = vld [vmem:[%s1 + $0x168] sm:$0xff]
  %v120 = vld [vmem:[%s1 + $0x170] sm:$0xff]
  %v121 = vld [vmem:[%s1 + $0x178] sm:$0xff]
  %v122 = vld [vmem:[%s1 + $0x180] sm:$0xff]
  %v123 = vld [vmem:[%s1 + $0x188] sm:$0xff]
  %v124 = vld [vmem:[%s1 + $0x190] sm:$0xff]
  %v125 = vld [vmem:[%s1 + $0x198] sm:$0xff]
  %v126 = vld [vmem:[%s1 + $0x1a0] sm:$0xff]
  %v127 = vld [vmem:[%s1 + $0x1a8] sm:$0xff]
  %v128 = vld [vmem:[%s1 + $0x1b0] sm:$0xff]
  %v129 = vld [vmem:[%s1 + $0x1b8] sm:$0xff]
  %v130 = vld [vmem:[%s1 + $0x1c0] sm:$0xff]
  %v131 = vld [vmem:[%s1 + $0x1c8] sm:$0xff]
  %v132 = vld [vmem:[%s1 + $0x1d0] sm:$0xff]
  %v133 = vld [vmem:[%s1 + $0x1d8] sm:$0xff]
  %v134 = vld [vmem:[%s1 + $0x1e0] sm:$0xff]
  %v135 = vld [vmem:[%s1 + $0x1e8] sm:$0xff]
  %v136 = vld [vmem:[%s1 + $0x1f0] sm:$0xff]
  %v137 = vlaneseq
  %v138 = vand.u32 %v137, 127
  %139 = vset.pattern.permute.xlu0 0
  %140 = vperm.xlu0 %139, %v74
  %v141 = vpop.permute.xlu0 %140
  %142 = vset.pattern.permute.xlu0 0
  %143 = vperm.xlu0 %142, %v75
  %v144 = vpop.permute.xlu0 %143
  %145 = vset.pattern.permute.xlu0 0
  %146 = vperm.xlu0 %145, %v76
  %v147 = vpop.permute.xlu0 %146
  %148 = vset.pattern.permute.xlu0 0
  %149 = vperm.xlu0 %148, %v77
  %v150 = vpop.permute.xlu0 %149
  %151 = vset.pattern.permute.xlu0 0
  %152 = vperm.xlu0 %151, %v78
  %v153 = vpop.permute.xlu0 %152
  %154 = vset.pattern.permute.xlu0 0
  %155 = vperm.xlu0 %154, %v79
  %v156 = vpop.permute.xlu0 %155
  %157 = vset.pattern.permute.xlu0 0
  %158 = vperm.xlu0 %157, %v80
  %v159 = vpop.permute.xlu0 %158
  %160 = vset.pattern.permute.xlu0 0
  %161 = vperm.xlu0 %160, %v81
  %v162 = vpop.permute.xlu0 %161
  %163 = vset.pattern.permute.xlu0 0
  %164 = vperm.xlu0 %163, %v82
  %v165 = vpop.permute.xlu0 %164
  %166 = vset.pattern.permute.xlu0 0
  %167 = vperm.xlu0 %166, %v83
  %v168 = vpop.permute.xlu0 %167
  %169 = vset.pattern.permute.xlu0 0
  %170 = vperm.xlu0 %169, %v84
  %v171 = vpop.permute.xlu0 %170
  %172 = vset.pattern.permute.xlu0 0
  %173 = vperm.xlu0 %172, %v85
  %v174 = vpop.permute.xlu0 %173
  %175 = vset.pattern.permute.xlu0 0
  %176 = vperm.xlu0 %175, %v86
  %v177 = vpop.permute.xlu0 %176
  %178 = vset.pattern.permute.xlu0 0
  %179 = vperm.xlu0 %178, %v87
  %v180 = vpop.permute.xlu0 %179
  %181 = vset.pattern.permute.xlu0 0
  %182 = vperm.xlu0 %181, %v88
  %v183 = vpop.permute.xlu0 %182
  %184 = vset.pattern.permute.xlu0 0
  %185 = vperm.xlu0 %184, %v89
  %v186 = vpop.permute.xlu0 %185
  %187 = vset.pattern.permute.xlu0 0
  %188 = vperm.xlu0 %187, %v90
  %v189 = vpop.permute.xlu0 %188
  %190 = vset.pattern.permute.xlu0 0
  %191 = vperm.xlu0 %190, %v91
  %v192 = vpop.permute.xlu0 %191
  %193 = vset.pattern.permute.xlu0 0
  %194 = vperm.xlu0 %193, %v92
  %v195 = vpop.permute.xlu0 %194
  %196 = vset.pattern.permute.xlu0 0
  %197 = vperm.xlu0 %196, %v93
  %v198 = vpop.permute.xlu0 %197
  %199 = vset.pattern.permute.xlu0 0
  %200 = vperm.xlu0 %199, %v94
  %v201 = vpop.permute.xlu0 %200
  %202 = vset.pattern.permute.xlu0 0
  %203 = vperm.xlu0 %202, %v95
  %v204 = vpop.permute.xlu0 %203
  %205 = vset.pattern.permute.xlu0 0
  %206 = vperm.xlu0 %205, %v96
  %v207 = vpop.permute.xlu0 %206
  %208 = vset.pattern.permute.xlu0 0
  %209 = vperm.xlu0 %208, %v97
  %v210 = vpop.permute.xlu0 %209
  %211 = vset.pattern.permute.xlu0 0
  %212 = vperm.xlu0 %211, %v98
  %v213 = vpop.permute.xlu0 %212
  %214 = vset.pattern.permute.xlu0 0
  %215 = vperm.xlu0 %214, %v99
  %v216 = vpop.permute.xlu0 %215
  %217 = vset.pattern.permute.xlu0 0
  %218 = vperm.xlu0 %217, %v100
  %v219 = vpop.permute.xlu0 %218
  %220 = vset.pattern.permute.xlu0 0
  %221 = vperm.xlu0 %220, %v101
  %v222 = vpop.permute.xlu0 %221
  %223 = vset.pattern.permute.xlu0 0
  %224 = vperm.xlu0 %223, %v102
  %v225 = vpop.permute.xlu0 %224
  %226 = vset.pattern.permute.xlu0 0
  %227 = vperm.xlu0 %226, %v103
  %v228 = vpop.permute.xlu0 %227
  %229 = vset.pattern.permute.xlu0 0
  %230 = vperm.xlu0 %229, %v104
  %v231 = vpop.permute.xlu0 %230
  %232 = vset.pattern.permute.xlu0 0
  %233 = vperm.xlu0 %232, %v105
  %v234 = vpop.permute.xlu0 %233
  %235 = vset.pattern.permute.xlu0 0
  %236 = vperm.xlu0 %235, %v106
  %v237 = vpop.permute.xlu0 %236
  %238 = vset.pattern.permute.xlu0 0
  %239 = vperm.xlu0 %238, %v107
  %v240 = vpop.permute.xlu0 %239
  %241 = vset.pattern.permute.xlu0 0
  %242 = vperm.xlu0 %241, %v108
  %v243 = vpop.permute.xlu0 %242
  %244 = vset.pattern.permute.xlu0 0
  %245 = vperm.xlu0 %244, %v109
  %v246 = vpop.permute.xlu0 %245
  %247 = vset.pattern.permute.xlu0 0
  %248 = vperm.xlu0 %247, %v110
  %v249 = vpop.permute.xlu0 %248
  %250 = vset.pattern.permute.xlu0 0
  %251 = vperm.xlu0 %250, %v111
  %v252 = vpop.permute.xlu0 %251
  %253 = vset.pattern.permute.xlu0 0
  %254 = vperm.xlu0 %253, %v112
  %v255 = vpop.permute.xlu0 %254
  %256 = vset.pattern.permute.xlu0 0
  %257 = vperm.xlu0 %256, %v113
  %v258 = vpop.permute.xlu0 %257
  %259 = vset.pattern.permute.xlu0 0
  %260 = vperm.xlu0 %259, %v114
  %v261 = vpop.permute.xlu0 %260
  %262 = vset.pattern.permute.xlu0 0
  %263 = vperm.xlu0 %262, %v115
  %v264 = vpop.permute.xlu0 %263
  %265 = vset.pattern.permute.xlu0 0
  %266 = vperm.xlu0 %265, %v116
  %v267 = vpop.permute.xlu0 %266
  %268 = vset.pattern.permute.xlu0 0
  %269 = vperm.xlu0 %268, %v117
  %v270 = vpop.permute.xlu0 %269
  %271 = vset.pattern.permute.xlu0 0
  %272 = vperm.xlu0 %271, %v118
  %v273 = vpop.permute.xlu0 %272
  %274 = vset.pattern.permute.xlu0 0
  %275 = vperm.xlu0 %274, %v119
  %v276 = vpop.permute.xlu0 %275
  %277 = vset.pattern.permute.xlu0 0
  %278 = vperm.xlu0 %277, %v120
  %v279 = vpop.permute.xlu0 %278
  %280 = vset.pattern.permute.xlu0 0
  %281 = vperm.xlu0 %280, %v121
  %v282 = vpop.permute.xlu0 %281
  %283 = vset.pattern.permute.xlu0 0
  %284 = vperm.xlu0 %283, %v122
  %v285 = vpop.permute.xlu0 %284
  %286 = vset.pattern.permute.xlu0 0
  %287 = vperm.xlu0 %286, %v123
  %v288 = vpop.permute.xlu0 %287
  %289 = vset.pattern.permute.xlu0 0
  %290 = vperm.xlu0 %289, %v124
  %v291 = vpop.permute.xlu0 %290
  %292 = vset.pattern.permute.xlu0 0
  %293 = vperm.xlu0 %292, %v125
  %v294 = vpop.permute.xlu0 %293
  %295 = vset.pattern.permute.xlu0 0
  %296 = vperm.xlu0 %295, %v126
  %v297 = vpop.permute.xlu0 %296
  %298 = vset.pattern.permute.xlu0 0
  %299 = vperm.xlu0 %298, %v127
  %v300 = vpop.permute.xlu0 %299
  %301 = vset.pattern.permute.xlu0 0
  %302 = vperm.xlu0 %301, %v128
  %v303 = vpop.permute.xlu0 %302
  %304 = vset.pattern.permute.xlu0 0
  %305 = vperm.xlu0 %304, %v129
  %v306 = vpop.permute.xlu0 %305
  %307 = vset.pattern.permute.xlu0 0
  %308 = vperm.xlu0 %307, %v130
  %v309 = vpop.permute.xlu0 %308
  %310 = vset.pattern.permute.xlu0 0
  %311 = vperm.xlu0 %310, %v131
  %v312 = vpop.permute.xlu0 %311
  %313 = vset.pattern.permute.xlu0 0
  %314 = vperm.xlu0 %313, %v132
  %v315 = vpop.permute.xlu0 %314
  %316 = vset.pattern.permute.xlu0 0
  %317 = vperm.xlu0 %316, %v133
  %v318 = vpop.permute.xlu0 %317
  %319 = vset.pattern.permute.xlu0 0
  %320 = vperm.xlu0 %319, %v134
  %v321 = vpop.permute.xlu0 %320
  %322 = vset.pattern.permute.xlu0 0
  %323 = vperm.xlu0 %322, %v135
  %v324 = vpop.permute.xlu0 %323
  %325 = vset.pattern.permute.xlu0 0
  %326 = vperm.xlu0 %325, %v136
  %v327 = vpop.permute.xlu0 %326
  %vm328 = vcmp.eq.s32.totalorder %v138, %v141
  %vm329 = vcmp.eq.s32.totalorder %v138, %v144
  %vm330 = vcmp.eq.s32.totalorder %v138, %v147
  %vm331 = vcmp.eq.s32.totalorder %v138, %v150
  %vm332 = vcmp.eq.s32.totalorder %v138, %v153
  %vm333 = vcmp.eq.s32.totalorder %v138, %v156
  %vm334 = vcmp.eq.s32.totalorder %v138, %v159
  %vm335 = vcmp.eq.s32.totalorder %v138, %v162
  %vm336 = vcmp.eq.s32.totalorder %v138, %v165
  %vm337 = vcmp.eq.s32.totalorder %v138, %v168
  %vm338 = vcmp.eq.s32.totalorder %v138, %v171
  %vm339 = vcmp.eq.s32.totalorder %v138, %v174
  %vm340 = vcmp.eq.s32.totalorder %v138, %v177
  %vm341 = vcmp.eq.s32.totalorder %v138, %v180
  %vm342 = vcmp.eq.s32.totalorder %v138, %v183
  %vm343 = vcmp.eq.s32.totalorder %v138, %v186
  %vm344 = vcmp.eq.s32.totalorder %v138, %v189
  %vm345 = vcmp.eq.s32.totalorder %v138, %v192
  %vm346 = vcmp.eq.s32.totalorder %v138, %v195
  %vm347 = vcmp.eq.s32.totalorder %v138, %v198
  %vm348 = vcmp.eq.s32.totalorder %v138, %v201
  %vm349 = vcmp.eq.s32.totalorder %v138, %v204
  %vm350 = vcmp.eq.s32.totalorder %v138, %v207
  %vm351 = vcmp.eq.s32.totalorder %v138, %v210
  %vm352 = vcmp.eq.s32.totalorder %v138, %v213
  %vm353 = vcmp.eq.s32.totalorder %v138, %v216
  %vm354 = vcmp.eq.s32.totalorder %v138, %v219
  %vm355 = vcmp.eq.s32.totalorder %v138, %v222
  %vm356 = vcmp.eq.s32.totalorder %v138, %v225
  %vm357 = vcmp.eq.s32.totalorder %v138, %v228
  %vm358 = vcmp.eq.s32.totalorder %v138, %v231
  %vm359 = vcmp.eq.s32.totalorder %v138, %v234
  %vm360 = vcmp.eq.s32.totalorder %v138, %v237
  %vm361 = vcmp.eq.s32.totalorder %v138, %v240
  %vm362 = vcmp.eq.s32.totalorder %v138, %v243
  %vm363 = vcmp.eq.s32.totalorder %v138, %v246
  %vm364 = vcmp.eq.s32.totalorder %v138, %v249
  %vm365 = vcmp.eq.s32.totalorder %v138, %v252
  %vm366 = vcmp.eq.s32.totalorder %v138, %v255
  %vm367 = vcmp.eq.s32.totalorder %v138, %v258
  %vm368 = vcmp.eq.s32.totalorder %v138, %v261
  %vm369 = vcmp.eq.s32.totalorder %v138, %v264
  %vm370 = vcmp.eq.s32.totalorder %v138, %v267
  %vm371 = vcmp.eq.s32.totalorder %v138, %v270
  %vm372 = vcmp.eq.s32.totalorder %v138, %v273
  %vm373 = vcmp.eq.s32.totalorder %v138, %v276
  %vm374 = vcmp.eq.s32.totalorder %v138, %v279
  %vm375 = vcmp.eq.s32.totalorder %v138, %v282
  %vm376 = vcmp.eq.s32.totalorder %v138, %v285
  %vm377 = vcmp.eq.s32.totalorder %v138, %v288
  %vm378 = vcmp.eq.s32.totalorder %v138, %v291
  %vm379 = vcmp.eq.s32.totalorder %v138, %v294
  %vm380 = vcmp.eq.s32.totalorder %v138, %v297
  %vm381 = vcmp.eq.s32.totalorder %v138, %v300
  %vm382 = vcmp.eq.s32.totalorder %v138, %v303
  %vm383 = vcmp.eq.s32.totalorder %v138, %v306
  %vm384 = vcmp.eq.s32.totalorder %v138, %v309
  %vm385 = vcmp.eq.s32.totalorder %v138, %v312
  %vm386 = vcmp.eq.s32.totalorder %v138, %v315
  %vm387 = vcmp.eq.s32.totalorder %v138, %v318
  %vm388 = vcmp.eq.s32.totalorder %v138, %v321
  %vm389 = vcmp.eq.s32.totalorder %v138, %v324
  %vm390 = vcmp.eq.s32.totalorder %v138, %v327
  %v391 = vsel %vm328, %v11, 0.0
  %v392 = vsel %vm329, %v12, 0.0
  %v393 = vsel %vm330, %v13, 0.0
  %v394 = vsel %vm331, %v14, 0.0
  %v395 = vsel %vm332, %v15, 0.0
  %v396 = vsel %vm333, %v16, 0.0
  %v397 = vsel %vm334, %v17, 0.0
  %v398 = vsel %vm335, %v18, 0.0
  %v399 = vsel %vm336, %v19, 0.0
  %v400 = vsel %vm337, %v20, 0.0
  %v401 = vsel %vm338, %v21, 0.0
  %v402 = vsel %vm339, %v22, 0.0
  %v403 = vsel %vm340, %v23, 0.0
  %v404 = vsel %vm341, %v24, 0.0
  %v405 = vsel %vm342, %v25, 0.0
  %v406 = vsel %vm343, %v26, 0.0
  %v407 = vsel %vm344, %v27, 0.0
  %v408 = vsel %vm345, %v28, 0.0
  %v409 = vsel %vm346, %v29, 0.0
  %v410 = vsel %vm347, %v30, 0.0
  %v411 = vsel %vm348, %v31, 0.0
  %v412 = vsel %vm349, %v32, 0.0
  %v413 = vsel %vm350, %v33, 0.0
  %v414 = vsel %vm351, %v34, 0.0
  %v415 = vsel %vm352, %v35, 0.0
  %v416 = vsel %vm353, %v36, 0.0
  %v417 = vsel %vm354, %v37, 0.0
  %v418 = vsel %vm355, %v38, 0.0
  %v419 = vsel %vm356, %v39, 0.0
  %v420 = vsel %vm357, %v40, 0.0
  %v421 = vsel %vm358, %v41, 0.0
  %v422 = vsel %vm359, %v42, 0.0
  %v423 = vsel %vm360, %v43, 0.0
  %v424 = vsel %vm361, %v44, 0.0
  %v425 = vsel %vm362, %v45, 0.0
  %v426 = vsel %vm363, %v46, 0.0
  %v427 = vsel %vm364, %v47, 0.0
  %v428 = vsel %vm365, %v48, 0.0
  %v429 = vsel %vm366, %v49, 0.0
  %v430 = vsel %vm367, %v50, 0.0
  %v431 = vsel %vm368, %v51, 0.0
  %v432 = vsel %vm369, %v52, 0.0
  %v433 = vsel %vm370, %v53, 0.0
  %v434 = vsel %vm371, %v54, 0.0
  %v435 = vsel %vm372, %v55, 0.0
  %v436 = vsel %vm373, %v56, 0.0
  %v437 = vsel %vm374, %v57, 0.0
  %v438 = vsel %vm375, %v58, 0.0
  %v439 = vsel %vm376, %v59, 0.0
  %v440 = vsel %vm377, %v60, 0.0
  %v441 = vsel %vm378, %v61, 0.0
  %v442 = vsel %vm379, %v62, 0.0
  %v443 = vsel %vm380, %v63, 0.0
  %v444 = vsel %vm381, %v64, 0.0
  %v445 = vsel %vm382, %v65, 0.0
  %v446 = vsel %vm383, %v66, 0.0
  %v447 = vsel %vm384, %v67, 0.0
  %v448 = vsel %vm385, %v68, 0.0
  %v449 = vsel %vm386, %v69, 0.0
  %v450 = vsel %vm387, %v70, 0.0
  %v451 = vsel %vm388, %v71, 0.0
  %v452 = vsel %vm389, %v72, 0.0
  %v453 = vsel %vm390, %v73, 0.0
  %vm454 = vcmask 261120
  %v455 = vsel %vm454, %v391, 0.0
  %456 = vadd.xlane.f32.xlu0 %v455
  %v457 = vpop.xlane.xlu0 %456
  %v458 = vsel %vm454, %v392, 0.0
  %459 = vadd.xlane.f32.xlu0 %v458
  %v460 = vpop.xlane.xlu0 %459
  %v461 = vsel %vm454, %v393, 0.0
  %462 = vadd.xlane.f32.xlu0 %v461
  %v463 = vpop.xlane.xlu0 %462
  %v464 = vsel %vm454, %v394, 0.0
  %465 = vadd.xlane.f32.xlu0 %v464
  %v466 = vpop.xlane.xlu0 %465
  %v467 = vsel %vm454, %v395, 0.0
  %468 = vadd.xlane.f32.xlu0 %v467
  %v469 = vpop.xlane.xlu0 %468
  %v470 = vsel %vm454, %v396, 0.0
  %471 = vadd.xlane.f32.xlu0 %v470
  %v472 = vpop.xlane.xlu0 %471
  %v473 = vsel %vm454, %v397, 0.0
  %474 = vadd.xlane.f32.xlu0 %v473
  %v475 = vpop.xlane.xlu0 %474
  %v476 = vsel %vm454, %v398, 0.0
  %477 = vadd.xlane.f32.xlu0 %v476
  %v478 = vpop.xlane.xlu0 %477
  %v479 = vsel %vm454, %v399, 0.0
  %480 = vadd.xlane.f32.xlu0 %v479
  %v481 = vpop.xlane.xlu0 %480
  %v482 = vsel %vm454, %v400, 0.0
  %483 = vadd.xlane.f32.xlu0 %v482
  %v484 = vpop.xlane.xlu0 %483
  %v485 = vsel %vm454, %v401, 0.0
  %486 = vadd.xlane.f32.xlu0 %v485
  %v487 = vpop.xlane.xlu0 %486
  %v488 = vsel %vm454, %v402, 0.0
  %489 = vadd.xlane.f32.xlu0 %v488
  %v490 = vpop.xlane.xlu0 %489
  %v491 = vsel %vm454, %v403, 0.0
  %492 = vadd.xlane.f32.xlu0 %v491
  %v493 = vpop.xlane.xlu0 %492
  %v494 = vsel %vm454, %v404, 0.0
  %495 = vadd.xlane.f32.xlu0 %v494
  %v496 = vpop.xlane.xlu0 %495
  %v497 = vsel %vm454, %v405, 0.0
  %498 = vadd.xlane.f32.xlu0 %v497
  %v499 = vpop.xlane.xlu0 %498
  %v500 = vsel %vm454, %v406, 0.0
  %501 = vadd.xlane.f32.xlu0 %v500
  %v502 = vpop.xlane.xlu0 %501
  %v503 = vsel %vm454, %v407, 0.0
  %504 = vadd.xlane.f32.xlu0 %v503
  %v505 = vpop.xlane.xlu0 %504
  %v506 = vsel %vm454, %v408, 0.0
  %507 = vadd.xlane.f32.xlu0 %v506
  %v508 = vpop.xlane.xlu0 %507
  %v509 = vsel %vm454, %v409, 0.0
  %510 = vadd.xlane.f32.xlu0 %v509
  %v511 = vpop.xlane.xlu0 %510
  %v512 = vsel %vm454, %v410, 0.0
  %513 = vadd.xlane.f32.xlu0 %v512
  %v514 = vpop.xlane.xlu0 %513
  %v515 = vsel %vm454, %v411, 0.0
  %516 = vadd.xlane.f32.xlu0 %v515
  %v517 = vpop.xlane.xlu0 %516
  %v518 = vsel %vm454, %v412, 0.0
  %519 = vadd.xlane.f32.xlu0 %v518
  %v520 = vpop.xlane.xlu0 %519
  %v521 = vsel %vm454, %v413, 0.0
  %522 = vadd.xlane.f32.xlu0 %v521
  %v523 = vpop.xlane.xlu0 %522
  %v524 = vsel %vm454, %v414, 0.0
  %525 = vadd.xlane.f32.xlu0 %v524
  %v526 = vpop.xlane.xlu0 %525
  %v527 = vsel %vm454, %v415, 0.0
  %528 = vadd.xlane.f32.xlu0 %v527
  %v529 = vpop.xlane.xlu0 %528
  %v530 = vsel %vm454, %v416, 0.0
  %531 = vadd.xlane.f32.xlu0 %v530
  %v532 = vpop.xlane.xlu0 %531
  %v533 = vsel %vm454, %v417, 0.0
  %534 = vadd.xlane.f32.xlu0 %v533
  %v535 = vpop.xlane.xlu0 %534
  %v536 = vsel %vm454, %v418, 0.0
  %537 = vadd.xlane.f32.xlu0 %v536
  %v538 = vpop.xlane.xlu0 %537
  %v539 = vsel %vm454, %v419, 0.0
  %540 = vadd.xlane.f32.xlu0 %v539
  %v541 = vpop.xlane.xlu0 %540
  %v542 = vsel %vm454, %v420, 0.0
  %543 = vadd.xlane.f32.xlu0 %v542
  %v544 = vpop.xlane.xlu0 %543
  %v545 = vsel %vm454, %v421, 0.0
  %546 = vadd.xlane.f32.xlu0 %v545
  %v547 = vpop.xlane.xlu0 %546
  %v548 = vsel %vm454, %v422, 0.0
  %549 = vadd.xlane.f32.xlu0 %v548
  %v550 = vpop.xlane.xlu0 %549
  %v551 = vsel %vm454, %v423, 0.0
  %552 = vadd.xlane.f32.xlu0 %v551
  %v553 = vpop.xlane.xlu0 %552
  %v554 = vsel %vm454, %v424, 0.0
  %555 = vadd.xlane.f32.xlu0 %v554
  %v556 = vpop.xlane.xlu0 %555
  %v557 = vsel %vm454, %v425, 0.0
  %558 = vadd.xlane.f32.xlu0 %v557
  %v559 = vpop.xlane.xlu0 %558
  %v560 = vsel %vm454, %v426, 0.0
  %561 = vadd.xlane.f32.xlu0 %v560
  %v562 = vpop.xlane.xlu0 %561
  %v563 = vsel %vm454, %v427, 0.0
  %564 = vadd.xlane.f32.xlu0 %v563
  %v565 = vpop.xlane.xlu0 %564
  %v566 = vsel %vm454, %v428, 0.0
  %567 = vadd.xlane.f32.xlu0 %v566
  %v568 = vpop.xlane.xlu0 %567
  %v569 = vsel %vm454, %v429, 0.0
  %570 = vadd.xlane.f32.xlu0 %v569
  %v571 = vpop.xlane.xlu0 %570
  %v572 = vsel %vm454, %v430, 0.0
  %573 = vadd.xlane.f32.xlu0 %v572
  %v574 = vpop.xlane.xlu0 %573
  %v575 = vsel %vm454, %v431, 0.0
  %576 = vadd.xlane.f32.xlu0 %v575
  %v577 = vpop.xlane.xlu0 %576
  %v578 = vsel %vm454, %v432, 0.0
  %579 = vadd.xlane.f32.xlu0 %v578
  %v580 = vpop.xlane.xlu0 %579
  %v581 = vsel %vm454, %v433, 0.0
  %582 = vadd.xlane.f32.xlu0 %v581
  %v583 = vpop.xlane.xlu0 %582
  %v584 = vsel %vm454, %v434, 0.0
  %585 = vadd.xlane.f32.xlu0 %v584
  %v586 = vpop.xlane.xlu0 %585
  %v587 = vsel %vm454, %v435, 0.0
  %588 = vadd.xlane.f32.xlu0 %v587
  %v589 = vpop.xlane.xlu0 %588
  %v590 = vsel %vm454, %v436, 0.0
  %591 = vadd.xlane.f32.xlu0 %v590
  %v592 = vpop.xlane.xlu0 %591
  %v593 = vsel %vm454, %v437, 0.0
  %594 = vadd.xlane.f32.xlu0 %v593
  %v595 = vpop.xlane.xlu0 %594
  %v596 = vsel %vm454, %v438, 0.0
  %597 = vadd.xlane.f32.xlu0 %v596
  %v598 = vpop.xlane.xlu0 %597
  %v599 = vsel %vm454, %v439, 0.0
  %600 = vadd.xlane.f32.xlu0 %v599
  %v601 = vpop.xlane.xlu0 %600
  %v602 = vsel %vm454, %v440, 0.0
  %603 = vadd.xlane.f32.xlu0 %v602
  %v604 = vpop.xlane.xlu0 %603
  %v605 = vsel %vm454, %v441, 0.0
  %606 = vadd.xlane.f32.xlu0 %v605
  %v607 = vpop.xlane.xlu0 %606
  %v608 = vsel %vm454, %v442, 0.0
  %609 = vadd.xlane.f32.xlu0 %v608
  %v610 = vpop.xlane.xlu0 %609
  %v611 = vsel %vm454, %v443, 0.0
  %612 = vadd.xlane.f32.xlu0 %v611
  %v613 = vpop.xlane.xlu0 %612
  %v614 = vsel %vm454, %v444, 0.0
  %615 = vadd.xlane.f32.xlu0 %v614
  %v616 = vpop.xlane.xlu0 %615
  %v617 = vsel %vm454, %v445, 0.0
  %618 = vadd.xlane.f32.xlu0 %v617
  %v619 = vpop.xlane.xlu0 %618
  %v620 = vsel %vm454, %v446, 0.0
  %621 = vadd.xlane.f32.xlu0 %v620
  %v622 = vpop.xlane.xlu0 %621
  %v623 = vsel %vm454, %v447, 0.0
  %624 = vadd.xlane.f32.xlu0 %v623
  %v625 = vpop.xlane.xlu0 %624
  %v626 = vsel %vm454, %v448, 0.0
  %627 = vadd.xlane.f32.xlu0 %v626
  %v628 = vpop.xlane.xlu0 %627
  %v629 = vsel %vm454, %v449, 0.0
  %630 = vadd.xlane.f32.xlu0 %v629
  %v631 = vpop.xlane.xlu0 %630
  %v632 = vsel %vm454, %v450, 0.0
  %633 = vadd.xlane.f32.xlu0 %v632
  %v634 = vpop.xlane.xlu0 %633
  %v635 = vsel %vm454, %v451, 0.0
  %636 = vadd.xlane.f32.xlu0 %v635
  %v637 = vpop.xlane.xlu0 %636
  %v638 = vsel %vm454, %v452, 0.0
  %639 = vadd.xlane.f32.xlu0 %v638
  %v640 = vpop.xlane.xlu0 %639
  %v641 = vsel %vm454, %v453, 0.0
  %642 = vadd.xlane.f32.xlu0 %v641
  %v643 = vpop.xlane.xlu0 %642
  %v644 = vsel %vm454, %v11, -inf
  %645 = vmax.xlane.f32.xlu0 %v644
  %v646 = vpop.xlane.xlu0 %645
  %v647 = vsel %vm454, %v12, -inf
  %648 = vmax.xlane.f32.xlu0 %v647
  %v649 = vpop.xlane.xlu0 %648
  %v650 = vsel %vm454, %v13, -inf
  %651 = vmax.xlane.f32.xlu0 %v650
  %v652 = vpop.xlane.xlu0 %651
  %v653 = vsel %vm454, %v14, -inf
  %654 = vmax.xlane.f32.xlu0 %v653
  %v655 = vpop.xlane.xlu0 %654
  %v656 = vsel %vm454, %v15, -inf
  %657 = vmax.xlane.f32.xlu0 %v656
  %v658 = vpop.xlane.xlu0 %657
  %v659 = vsel %vm454, %v16, -inf
  %660 = vmax.xlane.f32.xlu0 %v659
  %v661 = vpop.xlane.xlu0 %660
  %v662 = vsel %vm454, %v17, -inf
  %663 = vmax.xlane.f32.xlu0 %v662
  %v664 = vpop.xlane.xlu0 %663
  %v665 = vsel %vm454, %v18, -inf
  %666 = vmax.xlane.f32.xlu0 %v665
  %v667 = vpop.xlane.xlu0 %666
  %v668 = vsel %vm454, %v19, -inf
  %669 = vmax.xlane.f32.xlu0 %v668
  %v670 = vpop.xlane.xlu0 %669
  %v671 = vsel %vm454, %v20, -inf
  %672 = vmax.xlane.f32.xlu0 %v671
  %v673 = vpop.xlane.xlu0 %672
  %v674 = vsel %vm454, %v21, -inf
  %675 = vmax.xlane.f32.xlu0 %v674
  %v676 = vpop.xlane.xlu0 %675
  %v677 = vsel %vm454, %v22, -inf
  %678 = vmax.xlane.f32.xlu0 %v677
  %v679 = vpop.xlane.xlu0 %678
  %v680 = vsel %vm454, %v23, -inf
  %681 = vmax.xlane.f32.xlu0 %v680
  %v682 = vpop.xlane.xlu0 %681
  %v683 = vsel %vm454, %v24, -inf
  %684 = vmax.xlane.f32.xlu0 %v683
  %v685 = vpop.xlane.xlu0 %684
  %v686 = vsel %vm454, %v25, -inf
  %687 = vmax.xlane.f32.xlu0 %v686
  %v688 = vpop.xlane.xlu0 %687
  %v689 = vsel %vm454, %v26, -inf
  %690 = vmax.xlane.f32.xlu0 %v689
  %v691 = vpop.xlane.xlu0 %690
  %v692 = vsel %vm454, %v27, -inf
  %693 = vmax.xlane.f32.xlu0 %v692
  %v694 = vpop.xlane.xlu0 %693
  %v695 = vsel %vm454, %v28, -inf
  %696 = vmax.xlane.f32.xlu0 %v695
  %v697 = vpop.xlane.xlu0 %696
  %v698 = vsel %vm454, %v29, -inf
  %699 = vmax.xlane.f32.xlu0 %v698
  %v700 = vpop.xlane.xlu0 %699
  %v701 = vsel %vm454, %v30, -inf
  %702 = vmax.xlane.f32.xlu0 %v701
  %v703 = vpop.xlane.xlu0 %702
  %v704 = vsel %vm454, %v31, -inf
  %705 = vmax.xlane.f32.xlu0 %v704
  %v706 = vpop.xlane.xlu0 %705
  %v707 = vsel %vm454, %v32, -inf
  %708 = vmax.xlane.f32.xlu0 %v707
  %v709 = vpop.xlane.xlu0 %708
  %v710 = vsel %vm454, %v33, -inf
  %711 = vmax.xlane.f32.xlu0 %v710
  %v712 = vpop.xlane.xlu0 %711
  %v713 = vsel %vm454, %v34, -inf
  %714 = vmax.xlane.f32.xlu0 %v713
  %v715 = vpop.xlane.xlu0 %714
  %v716 = vsel %vm454, %v35, -inf
  %717 = vmax.xlane.f32.xlu0 %v716
  %v718 = vpop.xlane.xlu0 %717
  %v719 = vsel %vm454, %v36, -inf
  %720 = vmax.xlane.f32.xlu0 %v719
  %v721 = vpop.xlane.xlu0 %720
  %v722 = vsel %vm454, %v37, -inf
  %723 = vmax.xlane.f32.xlu0 %v722
  %v724 = vpop.xlane.xlu0 %723
  %v725 = vsel %vm454, %v38, -inf
  %726 = vmax.xlane.f32.xlu0 %v725
  %v727 = vpop.xlane.xlu0 %726
  %v728 = vsel %vm454, %v39, -inf
  %729 = vmax.xlane.f32.xlu0 %v728
  %v730 = vpop.xlane.xlu0 %729
  %v731 = vsel %vm454, %v40, -inf
  %732 = vmax.xlane.f32.xlu0 %v731
  %v733 = vpop.xlane.xlu0 %732
  %v734 = vsel %vm454, %v41, -inf
  %735 = vmax.xlane.f32.xlu0 %v734
  %v736 = vpop.xlane.xlu0 %735
  %v737 = vsel %vm454, %v42, -inf
  %738 = vmax.xlane.f32.xlu0 %v737
  %v739 = vpop.xlane.xlu0 %738
  %v740 = vsel %vm454, %v43, -inf
  %741 = vmax.xlane.f32.xlu0 %v740
  %v742 = vpop.xlane.xlu0 %741
  %v743 = vsel %vm454, %v44, -inf
  %744 = vmax.xlane.f32.xlu0 %v743
  %v745 = vpop.xlane.xlu0 %744
  %v746 = vsel %vm454, %v45, -inf
  %747 = vmax.xlane.f32.xlu0 %v746
  %v748 = vpop.xlane.xlu0 %747
  %v749 = vsel %vm454, %v46, -inf
  %750 = vmax.xlane.f32.xlu0 %v749
  %v751 = vpop.xlane.xlu0 %750
  %v752 = vsel %vm454, %v47, -inf
  %753 = vmax.xlane.f32.xlu0 %v752
  %v754 = vpop.xlane.xlu0 %753
  %v755 = vsel %vm454, %v48, -inf
  %756 = vmax.xlane.f32.xlu0 %v755
  %v757 = vpop.xlane.xlu0 %756
  %v758 = vsel %vm454, %v49, -inf
  %759 = vmax.xlane.f32.xlu0 %v758
  %v760 = vpop.xlane.xlu0 %759
  %v761 = vsel %vm454, %v50, -inf
  %762 = vmax.xlane.f32.xlu0 %v761
  %v763 = vpop.xlane.xlu0 %762
  %v764 = vsel %vm454, %v51, -inf
  %765 = vmax.xlane.f32.xlu0 %v764
  %v766 = vpop.xlane.xlu0 %765
  %v767 = vsel %vm454, %v52, -inf
  %768 = vmax.xlane.f32.xlu0 %v767
  %v769 = vpop.xlane.xlu0 %768
  %v770 = vsel %vm454, %v53, -inf
  %771 = vmax.xlane.f32.xlu0 %v770
  %v772 = vpop.xlane.xlu0 %771
  %v773 = vsel %vm454, %v54, -inf
  %774 = vmax.xlane.f32.xlu0 %v773
  %v775 = vpop.xlane.xlu0 %774
  %v776 = vsel %vm454, %v55, -inf
  %777 = vmax.xlane.f32.xlu0 %v776
  %v778 = vpop.xlane.xlu0 %777
  %v779 = vsel %vm454, %v56, -inf
  %780 = vmax.xlane.f32.xlu0 %v779
  %v781 = vpop.xlane.xlu0 %780
  %v782 = vsel %vm454, %v57, -inf
  %783 = vmax.xlane.f32.xlu0 %v782
  %v784 = vpop.xlane.xlu0 %783
  %v785 = vsel %vm454, %v58, -inf
  %786 = vmax.xlane.f32.xlu0 %v785
  %v787 = vpop.xlane.xlu0 %786
  %v788 = vsel %vm454, %v59, -inf
  %789 = vmax.xlane.f32.xlu0 %v788
  %v790 = vpop.xlane.xlu0 %789
  %v791 = vsel %vm454, %v60, -inf
  %792 = vmax.xlane.f32.xlu0 %v791
  %v793 = vpop.xlane.xlu0 %792
  %v794 = vsel %vm454, %v61, -inf
  %795 = vmax.xlane.f32.xlu0 %v794
  %v796 = vpop.xlane.xlu0 %795
  %v797 = vsel %vm454, %v62, -inf
  %798 = vmax.xlane.f32.xlu0 %v797
  %v799 = vpop.xlane.xlu0 %798
  %v800 = vsel %vm454, %v63, -inf
  %801 = vmax.xlane.f32.xlu0 %v800
  %v802 = vpop.xlane.xlu0 %801
  %v803 = vsel %vm454, %v64, -inf
  %804 = vmax.xlane.f32.xlu0 %v803
  %v805 = vpop.xlane.xlu0 %804
  %v806 = vsel %vm454, %v65, -inf
  %807 = vmax.xlane.f32.xlu0 %v806
  %v808 = vpop.xlane.xlu0 %807
  %v809 = vsel %vm454, %v66, -inf
  %810 = vmax.xlane.f32.xlu0 %v809
  %v811 = vpop.xlane.xlu0 %810
  %v812 = vsel %vm454, %v67, -inf
  %813 = vmax.xlane.f32.xlu0 %v812
  %v814 = vpop.xlane.xlu0 %813
  %v815 = vsel %vm454, %v68, -inf
  %816 = vmax.xlane.f32.xlu0 %v815
  %v817 = vpop.xlane.xlu0 %816
  %v818 = vsel %vm454, %v69, -inf
  %819 = vmax.xlane.f32.xlu0 %v818
  %v820 = vpop.xlane.xlu0 %819
  %v821 = vsel %vm454, %v70, -inf
  %822 = vmax.xlane.f32.xlu0 %v821
  %v823 = vpop.xlane.xlu0 %822
  %v824 = vsel %vm454, %v71, -inf
  %825 = vmax.xlane.f32.xlu0 %v824
  %v826 = vpop.xlane.xlu0 %825
  %v827 = vsel %vm454, %v72, -inf
  %828 = vmax.xlane.f32.xlu0 %v827
  %v829 = vpop.xlane.xlu0 %828
  %v830 = vsel %vm454, %v73, -inf
  %831 = vmax.xlane.f32.xlu0 %v830
  %v832 = vpop.xlane.xlu0 %831
  %v833 = vsub.f32 %v11, %v646
  %v834 = vsub.f32 %v12, %v649
  %v835 = vsub.f32 %v13, %v652
  %v836 = vsub.f32 %v14, %v655
  %v837 = vsub.f32 %v15, %v658
  %v838 = vsub.f32 %v16, %v661
  %v839 = vsub.f32 %v17, %v664
  %v840 = vsub.f32 %v18, %v667
  %v841 = vsub.f32 %v19, %v670
  %v842 = vsub.f32 %v20, %v673
  %v843 = vsub.f32 %v21, %v676
  %v844 = vsub.f32 %v22, %v679
  %v845 = vsub.f32 %v23, %v682
  %v846 = vsub.f32 %v24, %v685
  %v847 = vsub.f32 %v25, %v688
  %v848 = vsub.f32 %v26, %v691
  %v849 = vsub.f32 %v27, %v694
  %v850 = vsub.f32 %v28, %v697
  %v851 = vsub.f32 %v29, %v700
  %v852 = vsub.f32 %v30, %v703
  %v853 = vsub.f32 %v31, %v706
  %v854 = vsub.f32 %v32, %v709
  %v855 = vsub.f32 %v33, %v712
  %v856 = vsub.f32 %v34, %v715
  %v857 = vsub.f32 %v35, %v718
  %v858 = vsub.f32 %v36, %v721
  %v859 = vsub.f32 %v37, %v724
  %v860 = vsub.f32 %v38, %v727
  %v861 = vsub.f32 %v39, %v730
  %v862 = vsub.f32 %v40, %v733
  %v863 = vsub.f32 %v41, %v736
  %v864 = vsub.f32 %v42, %v739
  %v865 = vsub.f32 %v43, %v742
  %v866 = vsub.f32 %v44, %v745
  %v867 = vsub.f32 %v45, %v748
  %v868 = vsub.f32 %v46, %v751
  %v869 = vsub.f32 %v47, %v754
  %v870 = vsub.f32 %v48, %v757
  %v871 = vsub.f32 %v49, %v760
  %v872 = vsub.f32 %v50, %v763
  %v873 = vsub.f32 %v51, %v766
  %v874 = vsub.f32 %v52, %v769
  %v875 = vsub.f32 %v53, %v772
  %v876 = vsub.f32 %v54, %v775
  %v877 = vsub.f32 %v55, %v778
  %v878 = vsub.f32 %v56, %v781
  %v879 = vsub.f32 %v57, %v784
  %v880 = vsub.f32 %v58, %v787
  %v881 = vsub.f32 %v59, %v790
  %v882 = vsub.f32 %v60, %v793
  %v883 = vsub.f32 %v61, %v796
  %v884 = vsub.f32 %v62, %v799
  %v885 = vsub.f32 %v63, %v802
  %v886 = vsub.f32 %v64, %v805
  %v887 = vsub.f32 %v65, %v808
  %v888 = vsub.f32 %v66, %v811
  %v889 = vsub.f32 %v67, %v814
  %v890 = vsub.f32 %v68, %v817
  %v891 = vsub.f32 %v69, %v820
  %v892 = vsub.f32 %v70, %v823
  %v893 = vsub.f32 %v71, %v826
  %v894 = vsub.f32 %v72, %v829
  %v895 = vsub.f32 %v73, %v832
  %v896 = vmul.f32 %v833, 1.442695
  %v897 = vpow.pop %v896
  %v898 = vmul.f32 %v834, 1.442695
  %v899 = vpow.pop %v898
  %v900 = vmul.f32 %v835, 1.442695
  %v901 = vpow.pop %v900
  %v902 = vmul.f32 %v836, 1.442695
  %v903 = vpow.pop %v902
  %v904 = vmul.f32 %v837, 1.442695
  %v905 = vpow.pop %v904
  %v906 = vmul.f32 %v838, 1.442695
  %v907 = vpow.pop %v906
  %v908 = vmul.f32 %v839, 1.442695
  %v909 = vpow.pop %v908
  %v910 = vmul.f32 %v840, 1.442695
  %v911 = vpow.pop %v910
  %v912 = vmul.f32 %v841, 1.442695
  %v913 = vpow.pop %v912
  %v914 = vmul.f32 %v842, 1.442695
  %v915 = vpow.pop %v914
  %v916 = vmul.f32 %v843, 1.442695
  %v917 = vpow.pop %v916
  %v918 = vmul.f32 %v844, 1.442695
  %v919 = vpow.pop %v918
  %v920 = vmul.f32 %v845, 1.442695
  %v921 = vpow.pop %v920
  %v922 = vmul.f32 %v846, 1.442695
  %v923 = vpow.pop %v922
  %v924 = vmul.f32 %v847, 1.442695
  %v925 = vpow.pop %v924
  %v926 = vmul.f32 %v848, 1.442695
  %v927 = vpow.pop %v926
  %v928 = vmul.f32 %v849, 1.442695
  %v929 = vpow.pop %v928
  %v930 = vmul.f32 %v850, 1.442695
  %v931 = vpow.pop %v930
  %v932 = vmul.f32 %v851, 1.442695
  %v933 = vpow.pop %v932
  %v934 = vmul.f32 %v852, 1.442695
  %v935 = vpow.pop %v934
  %v936 = vmul.f32 %v853, 1.442695
  %v937 = vpow.pop %v936
  %v938 = vmul.f32 %v854, 1.442695
  %v939 = vpow.pop %v938
  %v940 = vmul.f32 %v855, 1.442695
  %v941 = vpow.pop %v940
  %v942 = vmul.f32 %v856, 1.442695
  %v943 = vpow.pop %v942
  %v944 = vmul.f32 %v857, 1.442695
  %v945 = vpow.pop %v944
  %v946 = vmul.f32 %v858, 1.442695
  %v947 = vpow.pop %v946
  %v948 = vmul.f32 %v859, 1.442695
  %v949 = vpow.pop %v948
  %v950 = vmul.f32 %v860, 1.442695
  %v951 = vpow.pop %v950
  %v952 = vmul.f32 %v861, 1.442695
  %v953 = vpow.pop %v952
  %v954 = vmul.f32 %v862, 1.442695
  %v955 = vpow.pop %v954
  %v956 = vmul.f32 %v863, 1.442695
  %v957 = vpow.pop %v956
  %v958 = vmul.f32 %v864, 1.442695
  %v959 = vpow.pop %v958
  %v960 = vmul.f32 %v865, 1.442695
  %v961 = vpow.pop %v960
  %v962 = vmul.f32 %v866, 1.442695
  %v963 = vpow.pop %v962
  %v964 = vmul.f32 %v867, 1.442695
  %v965 = vpow.pop %v964
  %v966 = vmul.f32 %v868, 1.442695
  %v967 = vpow.pop %v966
  %v968 = vmul.f32 %v869, 1.442695
  %v969 = vpow.pop %v968
  %v970 = vmul.f32 %v870, 1.442695
  %v971 = vpow.pop %v970
  %v972 = vmul.f32 %v871, 1.442695
  %v973 = vpow.pop %v972
  %v974 = vmul.f32 %v872, 1.442695
  %v975 = vpow.pop %v974
  %v976 = vmul.f32 %v873, 1.442695
  %v977 = vpow.pop %v976
  %v978 = vmul.f32 %v874, 1.442695
  %v979 = vpow.pop %v978
  %v980 = vmul.f32 %v875, 1.442695
  %v981 = vpow.pop %v980
  %v982 = vmul.f32 %v876, 1.442695
  %v983 = vpow.pop %v982
  %v984 = vmul.f32 %v877, 1.442695
  %v985 = vpow.pop %v984
  %v986 = vmul.f32 %v878, 1.442695
  %v987 = vpow.pop %v986
  %v988 = vmul.f32 %v879, 1.442695
  %v989 = vpow.pop %v988
  %v990 = vmul.f32 %v880, 1.442695
  %v991 = vpow.pop %v990
  %v992 = vmul.f32 %v881, 1.442695
  %v993 = vpow.pop %v992
  %v994 = vmul.f32 %v882, 1.442695
  %v995 = vpow.pop %v994
  %v996 = vmul.f32 %v883, 1.442695
  %v997 = vpow.pop %v996
  %v998 = vmul.f32 %v884, 1.442695
  %v999 = vpow.pop %v998
  %v1000 = vmul.f32 %v885, 1.442695
  %v1001 = vpow.pop %v1000
  %v1002 = vmul.f32 %v886, 1.442695
  %v1003 = vpow.pop %v1002
  %v1004 = vmul.f32 %v887, 1.442695
  %v1005 = vpow.pop %v1004
  %v1006 = vmul.f32 %v888, 1.442695
  %v1007 = vpow.pop %v1006
  %v1008 = vmul.f32 %v889, 1.442695
  %v1009 = vpow.pop %v1008
  %v1010 = vmul.f32 %v890, 1.442695
  %v1011 = vpow.pop %v1010
  %v1012 = vmul.f32 %v891, 1.442695
  %v1013 = vpow.pop %v1012
  %v1014 = vmul.f32 %v892, 1.442695
  %v1015 = vpow.pop %v1014
  %v1016 = vmul.f32 %v893, 1.442695
  %v1017 = vpow.pop %v1016
  %v1018 = vmul.f32 %v894, 1.442695
  %v1019 = vpow.pop %v1018
  %v1020 = vmul.f32 %v895, 1.442695
  %v1021 = vpow.pop %v1020
  %v1022 = vsel %vm454, %v897, 0.0
  %1023 = vadd.xlane.f32.xlu0 %v1022
  %v1024 = vpop.xlane.xlu0 %1023
  %v1025 = vsel %vm454, %v899, 0.0
  %1026 = vadd.xlane.f32.xlu0 %v1025
  %v1027 = vpop.xlane.xlu0 %1026
  %v1028 = vsel %vm454, %v901, 0.0
  %1029 = vadd.xlane.f32.xlu0 %v1028
  %v1030 = vpop.xlane.xlu0 %1029
  %v1031 = vsel %vm454, %v903, 0.0
  %1032 = vadd.xlane.f32.xlu0 %v1031
  %v1033 = vpop.xlane.xlu0 %1032
  %v1034 = vsel %vm454, %v905, 0.0
  %1035 = vadd.xlane.f32.xlu0 %v1034
  %v1036 = vpop.xlane.xlu0 %1035
  %v1037 = vsel %vm454, %v907, 0.0
  %1038 = vadd.xlane.f32.xlu0 %v1037
  %v1039 = vpop.xlane.xlu0 %1038
  %v1040 = vsel %vm454, %v909, 0.0
  %1041 = vadd.xlane.f32.xlu0 %v1040
  %v1042 = vpop.xlane.xlu0 %1041
  %v1043 = vsel %vm454, %v911, 0.0
  %1044 = vadd.xlane.f32.xlu0 %v1043
  %v1045 = vpop.xlane.xlu0 %1044
  %v1046 = vsel %vm454, %v913, 0.0
  %1047 = vadd.xlane.f32.xlu0 %v1046
  %v1048 = vpop.xlane.xlu0 %1047
  %v1049 = vsel %vm454, %v915, 0.0
  %1050 = vadd.xlane.f32.xlu0 %v1049
  %v1051 = vpop.xlane.xlu0 %1050
  %v1052 = vsel %vm454, %v917, 0.0
  %1053 = vadd.xlane.f32.xlu0 %v1052
  %v1054 = vpop.xlane.xlu0 %1053
  %v1055 = vsel %vm454, %v919, 0.0
  %1056 = vadd.xlane.f32.xlu0 %v1055
  %v1057 = vpop.xlane.xlu0 %1056
  %v1058 = vsel %vm454, %v921, 0.0
  %1059 = vadd.xlane.f32.xlu0 %v1058
  %v1060 = vpop.xlane.xlu0 %1059
  %v1061 = vsel %vm454, %v923, 0.0
  %1062 = vadd.xlane.f32.xlu0 %v1061
  %v1063 = vpop.xlane.xlu0 %1062
  %v1064 = vsel %vm454, %v925, 0.0
  %1065 = vadd.xlane.f32.xlu0 %v1064
  %v1066 = vpop.xlane.xlu0 %1065
  %v1067 = vsel %vm454, %v927, 0.0
  %1068 = vadd.xlane.f32.xlu0 %v1067
  %v1069 = vpop.xlane.xlu0 %1068
  %v1070 = vsel %vm454, %v929, 0.0
  %1071 = vadd.xlane.f32.xlu0 %v1070
  %v1072 = vpop.xlane.xlu0 %1071
  %v1073 = vsel %vm454, %v931, 0.0
  %1074 = vadd.xlane.f32.xlu0 %v1073
  %v1075 = vpop.xlane.xlu0 %1074
  %v1076 = vsel %vm454, %v933, 0.0
  %1077 = vadd.xlane.f32.xlu0 %v1076
  %v1078 = vpop.xlane.xlu0 %1077
  %v1079 = vsel %vm454, %v935, 0.0
  %1080 = vadd.xlane.f32.xlu0 %v1079
  %v1081 = vpop.xlane.xlu0 %1080
  %v1082 = vsel %vm454, %v937, 0.0
  %1083 = vadd.xlane.f32.xlu0 %v1082
  %v1084 = vpop.xlane.xlu0 %1083
  %v1085 = vsel %vm454, %v939, 0.0
  %1086 = vadd.xlane.f32.xlu0 %v1085
  %v1087 = vpop.xlane.xlu0 %1086
  %v1088 = vsel %vm454, %v941, 0.0
  %1089 = vadd.xlane.f32.xlu0 %v1088
  %v1090 = vpop.xlane.xlu0 %1089
  %v1091 = vsel %vm454, %v943, 0.0
  %1092 = vadd.xlane.f32.xlu0 %v1091
  %v1093 = vpop.xlane.xlu0 %1092
  %v1094 = vsel %vm454, %v945, 0.0
  %1095 = vadd.xlane.f32.xlu0 %v1094
  %v1096 = vpop.xlane.xlu0 %1095
  %v1097 = vsel %vm454, %v947, 0.0
  %1098 = vadd.xlane.f32.xlu0 %v1097
  %v1099 = vpop.xlane.xlu0 %1098
  %v1100 = vsel %vm454, %v949, 0.0
  %1101 = vadd.xlane.f32.xlu0 %v1100
  %v1102 = vpop.xlane.xlu0 %1101
  %v1103 = vsel %vm454, %v951, 0.0
  %1104 = vadd.xlane.f32.xlu0 %v1103
  %v1105 = vpop.xlane.xlu0 %1104
  %v1106 = vsel %vm454, %v953, 0.0
  %1107 = vadd.xlane.f32.xlu0 %v1106
  %v1108 = vpop.xlane.xlu0 %1107
  %v1109 = vsel %vm454, %v955, 0.0
  %1110 = vadd.xlane.f32.xlu0 %v1109
  %v1111 = vpop.xlane.xlu0 %1110
  %v1112 = vsel %vm454, %v957, 0.0
  %1113 = vadd.xlane.f32.xlu0 %v1112
  %v1114 = vpop.xlane.xlu0 %1113
  %v1115 = vsel %vm454, %v959, 0.0
  %1116 = vadd.xlane.f32.xlu0 %v1115
  %v1117 = vpop.xlane.xlu0 %1116
  %v1118 = vsel %vm454, %v961, 0.0
  %1119 = vadd.xlane.f32.xlu0 %v1118
  %v1120 = vpop.xlane.xlu0 %1119
  %v1121 = vsel %vm454, %v963, 0.0
  %1122 = vadd.xlane.f32.xlu0 %v1121
  %v1123 = vpop.xlane.xlu0 %1122
  %v1124 = vsel %vm454, %v965, 0.0
  %1125 = vadd.xlane.f32.xlu0 %v1124
  %v1126 = vpop.xlane.xlu0 %1125
  %v1127 = vsel %vm454, %v967, 0.0
  %1128 = vadd.xlane.f32.xlu0 %v1127
  %v1129 = vpop.xlane.xlu0 %1128
  %v1130 = vsel %vm454, %v969, 0.0
  %1131 = vadd.xlane.f32.xlu0 %v1130
  %v1132 = vpop.xlane.xlu0 %1131
  %v1133 = vsel %vm454, %v971, 0.0
  %1134 = vadd.xlane.f32.xlu0 %v1133
  %v1135 = vpop.xlane.xlu0 %1134
  %v1136 = vsel %vm454, %v973, 0.0
  %1137 = vadd.xlane.f32.xlu0 %v1136
  %v1138 = vpop.xlane.xlu0 %1137
  %v1139 = vsel %vm454, %v975, 0.0
  %1140 = vadd.xlane.f32.xlu0 %v1139
  %v1141 = vpop.xlane.xlu0 %1140
  %v1142 = vsel %vm454, %v977, 0.0
  %1143 = vadd.xlane.f32.xlu0 %v1142
  %v1144 = vpop.xlane.xlu0 %1143
  %v1145 = vsel %vm454, %v979, 0.0
  %1146 = vadd.xlane.f32.xlu0 %v1145
  %v1147 = vpop.xlane.xlu0 %1146
  %v1148 = vsel %vm454, %v981, 0.0
  %1149 = vadd.xlane.f32.xlu0 %v1148
  %v1150 = vpop.xlane.xlu0 %1149
  %v1151 = vsel %vm454, %v983, 0.0
  %1152 = vadd.xlane.f32.xlu0 %v1151
  %v1153 = vpop.xlane.xlu0 %1152
  %v1154 = vsel %vm454, %v985, 0.0
  %1155 = vadd.xlane.f32.xlu0 %v1154
  %v1156 = vpop.xlane.xlu0 %1155
  %v1157 = vsel %vm454, %v987, 0.0
  %1158 = vadd.xlane.f32.xlu0 %v1157
  %v1159 = vpop.xlane.xlu0 %1158
  %v1160 = vsel %vm454, %v989, 0.0
  %1161 = vadd.xlane.f32.xlu0 %v1160
  %v1162 = vpop.xlane.xlu0 %1161
  %v1163 = vsel %vm454, %v991, 0.0
  %1164 = vadd.xlane.f32.xlu0 %v1163
  %v1165 = vpop.xlane.xlu0 %1164
  %v1166 = vsel %vm454, %v993, 0.0
  %1167 = vadd.xlane.f32.xlu0 %v1166
  %v1168 = vpop.xlane.xlu0 %1167
  %v1169 = vsel %vm454, %v995, 0.0
  %1170 = vadd.xlane.f32.xlu0 %v1169
  %v1171 = vpop.xlane.xlu0 %1170
  %v1172 = vsel %vm454, %v997, 0.0
  %1173 = vadd.xlane.f32.xlu0 %v1172
  %v1174 = vpop.xlane.xlu0 %1173
  %v1175 = vsel %vm454, %v999, 0.0
  %1176 = vadd.xlane.f32.xlu0 %v1175
  %v1177 = vpop.xlane.xlu0 %1176
  %v1178 = vsel %vm454, %v1001, 0.0
  %1179 = vadd.xlane.f32.xlu0 %v1178
  %v1180 = vpop.xlane.xlu0 %1179
  %v1181 = vsel %vm454, %v1003, 0.0
  %1182 = vadd.xlane.f32.xlu0 %v1181
  %v1183 = vpop.xlane.xlu0 %1182
  %v1184 = vsel %vm454, %v1005, 0.0
  %1185 = vadd.xlane.f32.xlu0 %v1184
  %v1186 = vpop.xlane.xlu0 %1185
  %v1187 = vsel %vm454, %v1007, 0.0
  %1188 = vadd.xlane.f32.xlu0 %v1187
  %v1189 = vpop.xlane.xlu0 %1188
  %v1190 = vsel %vm454, %v1009, 0.0
  %1191 = vadd.xlane.f32.xlu0 %v1190
  %v1192 = vpop.xlane.xlu0 %1191
  %v1193 = vsel %vm454, %v1011, 0.0
  %1194 = vadd.xlane.f32.xlu0 %v1193
  %v1195 = vpop.xlane.xlu0 %1194
  %v1196 = vsel %vm454, %v1013, 0.0
  %1197 = vadd.xlane.f32.xlu0 %v1196
  %v1198 = vpop.xlane.xlu0 %1197
  %v1199 = vsel %vm454, %v1015, 0.0
  %1200 = vadd.xlane.f32.xlu0 %v1199
  %v1201 = vpop.xlane.xlu0 %1200
  %v1202 = vsel %vm454, %v1017, 0.0
  %1203 = vadd.xlane.f32.xlu0 %v1202
  %v1204 = vpop.xlane.xlu0 %1203
  %v1205 = vsel %vm454, %v1019, 0.0
  %1206 = vadd.xlane.f32.xlu0 %v1205
  %v1207 = vpop.xlane.xlu0 %1206
  %v1208 = vsel %vm454, %v1021, 0.0
  %1209 = vadd.xlane.f32.xlu0 %v1208
  %v1210 = vpop.xlane.xlu0 %1209
  %v1211 = vlog2.pop %v1024
  %v1212 = vmul.f32 %v1211, 0.6931472
  %v1213 = vlog2.pop %v1027
  %v1214 = vmul.f32 %v1213, 0.6931472
  %v1215 = vlog2.pop %v1030
  %v1216 = vmul.f32 %v1215, 0.6931472
  %v1217 = vlog2.pop %v1033
  %v1218 = vmul.f32 %v1217, 0.6931472
  %v1219 = vlog2.pop %v1036
  %v1220 = vmul.f32 %v1219, 0.6931472
  %v1221 = vlog2.pop %v1039
  %v1222 = vmul.f32 %v1221, 0.6931472
  %v1223 = vlog2.pop %v1042
  %v1224 = vmul.f32 %v1223, 0.6931472
  %v1225 = vlog2.pop %v1045
  %v1226 = vmul.f32 %v1225, 0.6931472
  %v1227 = vlog2.pop %v1048
  %v1228 = vmul.f32 %v1227, 0.6931472
  %v1229 = vlog2.pop %v1051
  %v1230 = vmul.f32 %v1229, 0.6931472
  %v1231 = vlog2.pop %v1054
  %v1232 = vmul.f32 %v1231, 0.6931472
  %v1233 = vlog2.pop %v1057
  %v1234 = vmul.f32 %v1233, 0.6931472
  %v1235 = vlog2.pop %v1060
  %v1236 = vmul.f32 %v1235, 0.6931472
  %v1237 = vlog2.pop %v1063
  %v1238 = vmul.f32 %v1237, 0.6931472
  %v1239 = vlog2.pop %v1066
  %v1240 = vmul.f32 %v1239, 0.6931472
  %v1241 = vlog2.pop %v1069
  %v1242 = vmul.f32 %v1241, 0.6931472
  %v1243 = vlog2.pop %v1072
  %v1244 = vmul.f32 %v1243, 0.6931472
  %v1245 = vlog2.pop %v1075
  %v1246 = vmul.f32 %v1245, 0.6931472
  %v1247 = vlog2.pop %v1078
  %v1248 = vmul.f32 %v1247, 0.6931472
  %v1249 = vlog2.pop %v1081
  %v1250 = vmul.f32 %v1249, 0.6931472
  %v1251 = vlog2.pop %v1084
  %v1252 = vmul.f32 %v1251, 0.6931472
  %v1253 = vlog2.pop %v1087
  %v1254 = vmul.f32 %v1253, 0.6931472
  %v1255 = vlog2.pop %v1090
  %v1256 = vmul.f32 %v1255, 0.6931472
  %v1257 = vlog2.pop %v1093
  %v1258 = vmul.f32 %v1257, 0.6931472
  %v1259 = vlog2.pop %v1096
  %v1260 = vmul.f32 %v1259, 0.6931472
  %v1261 = vlog2.pop %v1099
  %v1262 = vmul.f32 %v1261, 0.6931472
  %v1263 = vlog2.pop %v1102
  %v1264 = vmul.f32 %v1263, 0.6931472
  %v1265 = vlog2.pop %v1105
  %v1266 = vmul.f32 %v1265, 0.6931472
  %v1267 = vlog2.pop %v1108
  %v1268 = vmul.f32 %v1267, 0.6931472
  %v1269 = vlog2.pop %v1111
  %v1270 = vmul.f32 %v1269, 0.6931472
  %v1271 = vlog2.pop %v1114
  %v1272 = vmul.f32 %v1271, 0.6931472
  %v1273 = vlog2.pop %v1117
  %v1274 = vmul.f32 %v1273, 0.6931472
  %v1275 = vlog2.pop %v1120
  %v1276 = vmul.f32 %v1275, 0.6931472
  %v1277 = vlog2.pop %v1123
  %v1278 = vmul.f32 %v1277, 0.6931472
  %v1279 = vlog2.pop %v1126
  %v1280 = vmul.f32 %v1279, 0.6931472
  %v1281 = vlog2.pop %v1129
  %v1282 = vmul.f32 %v1281, 0.6931472
  %v1283 = vlog2.pop %v1132
  %v1284 = vmul.f32 %v1283, 0.6931472
  %v1285 = vlog2.pop %v1135
  %v1286 = vmul.f32 %v1285, 0.6931472
  %v1287 = vlog2.pop %v1138
  %v1288 = vmul.f32 %v1287, 0.6931472
  %v1289 = vlog2.pop %v1141
  %v1290 = vmul.f32 %v1289, 0.6931472
  %v1291 = vlog2.pop %v1144
  %v1292 = vmul.f32 %v1291, 0.6931472
  %v1293 = vlog2.pop %v1147
  %v1294 = vmul.f32 %v1293, 0.6931472
  %v1295 = vlog2.pop %v1150
  %v1296 = vmul.f32 %v1295, 0.6931472
  %v1297 = vlog2.pop %v1153
  %v1298 = vmul.f32 %v1297, 0.6931472
  %v1299 = vlog2.pop %v1156
  %v1300 = vmul.f32 %v1299, 0.6931472
  %v1301 = vlog2.pop %v1159
  %v1302 = vmul.f32 %v1301, 0.6931472
  %v1303 = vlog2.pop %v1162
  %v1304 = vmul.f32 %v1303, 0.6931472
  %v1305 = vlog2.pop %v1165
  %v1306 = vmul.f32 %v1305, 0.6931472
  %v1307 = vlog2.pop %v1168
  %v1308 = vmul.f32 %v1307, 0.6931472
  %v1309 = vlog2.pop %v1171
  %v1310 = vmul.f32 %v1309, 0.6931472
  %v1311 = vlog2.pop %v1174
  %v1312 = vmul.f32 %v1311, 0.6931472
  %v1313 = vlog2.pop %v1177
  %v1314 = vmul.f32 %v1313, 0.6931472
  %v1315 = vlog2.pop %v1180
  %v1316 = vmul.f32 %v1315, 0.6931472
  %v1317 = vlog2.pop %v1183
  %v1318 = vmul.f32 %v1317, 0.6931472
  %v1319 = vlog2.pop %v1186
  %v1320 = vmul.f32 %v1319, 0.6931472
  %v1321 = vlog2.pop %v1189
  %v1322 = vmul.f32 %v1321, 0.6931472
  %v1323 = vlog2.pop %v1192
  %v1324 = vmul.f32 %v1323, 0.6931472
  %v1325 = vlog2.pop %v1195
  %v1326 = vmul.f32 %v1325, 0.6931472
  %v1327 = vlog2.pop %v1198
  %v1328 = vmul.f32 %v1327, 0.6931472
  %v1329 = vlog2.pop %v1201
  %v1330 = vmul.f32 %v1329, 0.6931472
  %v1331 = vlog2.pop %v1204
  %v1332 = vmul.f32 %v1331, 0.6931472
  %v1333 = vlog2.pop %v1207
  %v1334 = vmul.f32 %v1333, 0.6931472
  %v1335 = vlog2.pop %v1210
  %v1336 = vmul.f32 %v1335, 0.6931472
  %v1337 = vsub.f32 %v457, %v646
  %v1338 = vsub.f32 %v460, %v649
  %v1339 = vsub.f32 %v463, %v652
  %v1340 = vsub.f32 %v466, %v655
  %v1341 = vsub.f32 %v469, %v658
  %v1342 = vsub.f32 %v472, %v661
  %v1343 = vsub.f32 %v475, %v664
  %v1344 = vsub.f32 %v478, %v667
  %v1345 = vsub.f32 %v481, %v670
  %v1346 = vsub.f32 %v484, %v673
  %v1347 = vsub.f32 %v487, %v676
  %v1348 = vsub.f32 %v490, %v679
  %v1349 = vsub.f32 %v493, %v682
  %v1350 = vsub.f32 %v496, %v685
  %v1351 = vsub.f32 %v499, %v688
  %v1352 = vsub.f32 %v502, %v691
  %v1353 = vsub.f32 %v505, %v694
  %v1354 = vsub.f32 %v508, %v697
  %v1355 = vsub.f32 %v511, %v700
  %v1356 = vsub.f32 %v514, %v703
  %v1357 = vsub.f32 %v517, %v706
  %v1358 = vsub.f32 %v520, %v709
  %v1359 = vsub.f32 %v523, %v712
  %v1360 = vsub.f32 %v526, %v715
  %v1361 = vsub.f32 %v529, %v718
  %v1362 = vsub.f32 %v532, %v721
  %v1363 = vsub.f32 %v535, %v724
  %v1364 = vsub.f32 %v538, %v727
  %v1365 = vsub.f32 %v541, %v730
  %v1366 = vsub.f32 %v544, %v733
  %v1367 = vsub.f32 %v547, %v736
  %v1368 = vsub.f32 %v550, %v739
  %v1369 = vsub.f32 %v553, %v742
  %v1370 = vsub.f32 %v556, %v745
  %v1371 = vsub.f32 %v559, %v748
  %v1372 = vsub.f32 %v562, %v751
  %v1373 = vsub.f32 %v565, %v754
  %v1374 = vsub.f32 %v568, %v757
  %v1375 = vsub.f32 %v571, %v760
  %v1376 = vsub.f32 %v574, %v763
  %v1377 = vsub.f32 %v577, %v766
  %v1378 = vsub.f32 %v580, %v769
  %v1379 = vsub.f32 %v583, %v772
  %v1380 = vsub.f32 %v586, %v775
  %v1381 = vsub.f32 %v589, %v778
  %v1382 = vsub.f32 %v592, %v781
  %v1383 = vsub.f32 %v595, %v784
  %v1384 = vsub.f32 %v598, %v787
  %v1385 = vsub.f32 %v601, %v790
  %v1386 = vsub.f32 %v604, %v793
  %v1387 = vsub.f32 %v607, %v796
  %v1388 = vsub.f32 %v610, %v799
  %v1389 = vsub.f32 %v613, %v802
  %v1390 = vsub.f32 %v616, %v805
  %v1391 = vsub.f32 %v619, %v808
  %v1392 = vsub.f32 %v622, %v811
  %v1393 = vsub.f32 %v625, %v814
  %v1394 = vsub.f32 %v628, %v817
  %v1395 = vsub.f32 %v631, %v820
  %v1396 = vsub.f32 %v634, %v823
  %v1397 = vsub.f32 %v637, %v826
  %v1398 = vsub.f32 %v640, %v829
  %v1399 = vsub.f32 %v643, %v832
  %v1400 = vsub.f32 %v1337, %v1212
  %v1401 = vsub.f32 %v1338, %v1214
  %v1402 = vsub.f32 %v1339, %v1216
  %v1403 = vsub.f32 %v1340, %v1218
  %v1404 = vsub.f32 %v1341, %v1220
  %v1405 = vsub.f32 %v1342, %v1222
  %v1406 = vsub.f32 %v1343, %v1224
  %v1407 = vsub.f32 %v1344, %v1226
  %v1408 = vsub.f32 %v1345, %v1228
  %v1409 = vsub.f32 %v1346, %v1230
  %v1410 = vsub.f32 %v1347, %v1232
  %v1411 = vsub.f32 %v1348, %v1234
  %v1412 = vsub.f32 %v1349, %v1236
  %v1413 = vsub.f32 %v1350, %v1238
  %v1414 = vsub.f32 %v1351, %v1240
  %v1415 = vsub.f32 %v1352, %v1242
  %v1416 = vsub.f32 %v1353, %v1244
  %v1417 = vsub.f32 %v1354, %v1246
  %v1418 = vsub.f32 %v1355, %v1248
  %v1419 = vsub.f32 %v1356, %v1250
  %v1420 = vsub.f32 %v1357, %v1252
  %v1421 = vsub.f32 %v1358, %v1254
  %v1422 = vsub.f32 %v1359, %v1256
  %v1423 = vsub.f32 %v1360, %v1258
  %v1424 = vsub.f32 %v1361, %v1260
  %v1425 = vsub.f32 %v1362, %v1262
  %v1426 = vsub.f32 %v1363, %v1264
  %v1427 = vsub.f32 %v1364, %v1266
  %v1428 = vsub.f32 %v1365, %v1268
  %v1429 = vsub.f32 %v1366, %v1270
  %v1430 = vsub.f32 %v1367, %v1272
  %v1431 = vsub.f32 %v1368, %v1274
  %v1432 = vsub.f32 %v1369, %v1276
  %v1433 = vsub.f32 %v1370, %v1278
  %v1434 = vsub.f32 %v1371, %v1280
  %v1435 = vsub.f32 %v1372, %v1282
  %v1436 = vsub.f32 %v1373, %v1284
  %v1437 = vsub.f32 %v1374, %v1286
  %v1438 = vsub.f32 %v1375, %v1288
  %v1439 = vsub.f32 %v1376, %v1290
  %v1440 = vsub.f32 %v1377, %v1292
  %v1441 = vsub.f32 %v1378, %v1294
  %v1442 = vsub.f32 %v1379, %v1296
  %v1443 = vsub.f32 %v1380, %v1298
  %v1444 = vsub.f32 %v1381, %v1300
  %v1445 = vsub.f32 %v1382, %v1302
  %v1446 = vsub.f32 %v1383, %v1304
  %v1447 = vsub.f32 %v1384, %v1306
  %v1448 = vsub.f32 %v1385, %v1308
  %v1449 = vsub.f32 %v1386, %v1310
  %v1450 = vsub.f32 %v1387, %v1312
  %v1451 = vsub.f32 %v1388, %v1314
  %v1452 = vsub.f32 %v1389, %v1316
  %v1453 = vsub.f32 %v1390, %v1318
  %v1454 = vsub.f32 %v1391, %v1320
  %v1455 = vsub.f32 %v1392, %v1322
  %v1456 = vsub.f32 %v1393, %v1324
  %v1457 = vsub.f32 %v1394, %v1326
  %v1458 = vsub.f32 %v1395, %v1328
  %v1459 = vsub.f32 %v1396, %v1330
  %v1460 = vsub.f32 %v1397, %v1332
  %v1461 = vsub.f32 %v1398, %v1334
  %v1462 = vsub.f32 %v1399, %v1336
  %v1463 = vmul.f32 %v1400, 1.442695
  %v1464 = vpow.pop %v1463
  %v1465 = vmul.f32 %v1401, 1.442695
  %v1466 = vpow.pop %v1465
  %v1467 = vmul.f32 %v1402, 1.442695
  %v1468 = vpow.pop %v1467
  %v1469 = vmul.f32 %v1403, 1.442695
  %v1470 = vpow.pop %v1469
  %v1471 = vmul.f32 %v1404, 1.442695
  %v1472 = vpow.pop %v1471
  %v1473 = vmul.f32 %v1405, 1.442695
  %v1474 = vpow.pop %v1473
  %v1475 = vmul.f32 %v1406, 1.442695
  %v1476 = vpow.pop %v1475
  %v1477 = vmul.f32 %v1407, 1.442695
  %v1478 = vpow.pop %v1477
  %v1479 = vmul.f32 %v1408, 1.442695
  %v1480 = vpow.pop %v1479
  %v1481 = vmul.f32 %v1409, 1.442695
  %v1482 = vpow.pop %v1481
  %v1483 = vmul.f32 %v1410, 1.442695
  %v1484 = vpow.pop %v1483
  %v1485 = vmul.f32 %v1411, 1.442695
  %v1486 = vpow.pop %v1485
  %v1487 = vmul.f32 %v1412, 1.442695
  %v1488 = vpow.pop %v1487
  %v1489 = vmul.f32 %v1413, 1.442695
  %v1490 = vpow.pop %v1489
  %v1491 = vmul.f32 %v1414, 1.442695
  %v1492 = vpow.pop %v1491
  %v1493 = vmul.f32 %v1415, 1.442695
  %v1494 = vpow.pop %v1493
  %v1495 = vmul.f32 %v1416, 1.442695
  %v1496 = vpow.pop %v1495
  %v1497 = vmul.f32 %v1417, 1.442695
  %v1498 = vpow.pop %v1497
  %v1499 = vmul.f32 %v1418, 1.442695
  %v1500 = vpow.pop %v1499
  %v1501 = vmul.f32 %v1419, 1.442695
  %v1502 = vpow.pop %v1501
  %v1503 = vmul.f32 %v1420, 1.442695
  %v1504 = vpow.pop %v1503
  %v1505 = vmul.f32 %v1421, 1.442695
  %v1506 = vpow.pop %v1505
  %v1507 = vmul.f32 %v1422, 1.442695
  %v1508 = vpow.pop %v1507
  %v1509 = vmul.f32 %v1423, 1.442695
  %v1510 = vpow.pop %v1509
  %v1511 = vmul.f32 %v1424, 1.442695
  %v1512 = vpow.pop %v1511
  %v1513 = vmul.f32 %v1425, 1.442695
  %v1514 = vpow.pop %v1513
  %v1515 = vmul.f32 %v1426, 1.442695
  %v1516 = vpow.pop %v1515
  %v1517 = vmul.f32 %v1427, 1.442695
  %v1518 = vpow.pop %v1517
  %v1519 = vmul.f32 %v1428, 1.442695
  %v1520 = vpow.pop %v1519
  %v1521 = vmul.f32 %v1429, 1.442695
  %v1522 = vpow.pop %v1521
  %v1523 = vmul.f32 %v1430, 1.442695
  %v1524 = vpow.pop %v1523
  %v1525 = vmul.f32 %v1431, 1.442695
  %v1526 = vpow.pop %v1525
  %v1527 = vmul.f32 %v1432, 1.442695
  %v1528 = vpow.pop %v1527
  %v1529 = vmul.f32 %v1433, 1.442695
  %v1530 = vpow.pop %v1529
  %v1531 = vmul.f32 %v1434, 1.442695
  %v1532 = vpow.pop %v1531
  %v1533 = vmul.f32 %v1435, 1.442695
  %v1534 = vpow.pop %v1533
  %v1535 = vmul.f32 %v1436, 1.442695
  %v1536 = vpow.pop %v1535
  %v1537 = vmul.f32 %v1437, 1.442695
  %v1538 = vpow.pop %v1537
  %v1539 = vmul.f32 %v1438, 1.442695
  %v1540 = vpow.pop %v1539
  %v1541 = vmul.f32 %v1439, 1.442695
  %v1542 = vpow.pop %v1541
  %v1543 = vmul.f32 %v1440, 1.442695
  %v1544 = vpow.pop %v1543
  %v1545 = vmul.f32 %v1441, 1.442695
  %v1546 = vpow.pop %v1545
  %v1547 = vmul.f32 %v1442, 1.442695
  %v1548 = vpow.pop %v1547
  %v1549 = vmul.f32 %v1443, 1.442695
  %v1550 = vpow.pop %v1549
  %v1551 = vmul.f32 %v1444, 1.442695
  %v1552 = vpow.pop %v1551
  %v1553 = vmul.f32 %v1445, 1.442695
  %v1554 = vpow.pop %v1553
  %v1555 = vmul.f32 %v1446, 1.442695
  %v1556 = vpow.pop %v1555
  %v1557 = vmul.f32 %v1447, 1.442695
  %v1558 = vpow.pop %v1557
  %v1559 = vmul.f32 %v1448, 1.442695
  %v1560 = vpow.pop %v1559
  %v1561 = vmul.f32 %v1449, 1.442695
  %v1562 = vpow.pop %v1561
  %v1563 = vmul.f32 %v1450, 1.442695
  %v1564 = vpow.pop %v1563
  %v1565 = vmul.f32 %v1451, 1.442695
  %v1566 = vpow.pop %v1565
  %v1567 = vmul.f32 %v1452, 1.442695
  %v1568 = vpow.pop %v1567
  %v1569 = vmul.f32 %v1453, 1.442695
  %v1570 = vpow.pop %v1569
  %v1571 = vmul.f32 %v1454, 1.442695
  %v1572 = vpow.pop %v1571
  %v1573 = vmul.f32 %v1455, 1.442695
  %v1574 = vpow.pop %v1573
  %v1575 = vmul.f32 %v1456, 1.442695
  %v1576 = vpow.pop %v1575
  %v1577 = vmul.f32 %v1457, 1.442695
  %v1578 = vpow.pop %v1577
  %v1579 = vmul.f32 %v1458, 1.442695
  %v1580 = vpow.pop %v1579
  %v1581 = vmul.f32 %v1459, 1.442695
  %v1582 = vpow.pop %v1581
  %v1583 = vmul.f32 %v1460, 1.442695
  %v1584 = vpow.pop %v1583
  %v1585 = vmul.f32 %v1461, 1.442695
  %v1586 = vpow.pop %v1585
  %v1587 = vmul.f32 %v1462, 1.442695
  %v1588 = vpow.pop %v1587
  %v1589 = vsub.f32 1.0, %v1464
  %v1590 = vsub.f32 1.0, %v1466
  %v1591 = vsub.f32 1.0, %v1468
  %v1592 = vsub.f32 1.0, %v1470
  %v1593 = vsub.f32 1.0, %v1472
  %v1594 = vsub.f32 1.0, %v1474
  %v1595 = vsub.f32 1.0, %v1476
  %v1596 = vsub.f32 1.0, %v1478
  %v1597 = vsub.f32 1.0, %v1480
  %v1598 = vsub.f32 1.0, %v1482
  %v1599 = vsub.f32 1.0, %v1484
  %v1600 = vsub.f32 1.0, %v1486
  %v1601 = vsub.f32 1.0, %v1488
  %v1602 = vsub.f32 1.0, %v1490
  %v1603 = vsub.f32 1.0, %v1492
  %v1604 = vsub.f32 1.0, %v1494
  %v1605 = vsub.f32 1.0, %v1496
  %v1606 = vsub.f32 1.0, %v1498
  %v1607 = vsub.f32 1.0, %v1500
  %v1608 = vsub.f32 1.0, %v1502
  %v1609 = vsub.f32 1.0, %v1504
  %v1610 = vsub.f32 1.0, %v1506
  %v1611 = vsub.f32 1.0, %v1508
  %v1612 = vsub.f32 1.0, %v1510
  %v1613 = vsub.f32 1.0, %v1512
  %v1614 = vsub.f32 1.0, %v1514
  %v1615 = vsub.f32 1.0, %v1516
  %v1616 = vsub.f32 1.0, %v1518
  %v1617 = vsub.f32 1.0, %v1520
  %v1618 = vsub.f32 1.0, %v1522
  %v1619 = vsub.f32 1.0, %v1524
  %v1620 = vsub.f32 1.0, %v1526
  %v1621 = vsub.f32 1.0, %v1528
  %v1622 = vsub.f32 1.0, %v1530
  %v1623 = vsub.f32 1.0, %v1532
  %v1624 = vsub.f32 1.0, %v1534
  %v1625 = vsub.f32 1.0, %v1536
  %v1626 = vsub.f32 1.0, %v1538
  %v1627 = vsub.f32 1.0, %v1540
  %v1628 = vsub.f32 1.0, %v1542
  %v1629 = vsub.f32 1.0, %v1544
  %v1630 = vsub.f32 1.0, %v1546
  %v1631 = vsub.f32 1.0, %v1548
  %v1632 = vsub.f32 1.0, %v1550
  %v1633 = vsub.f32 1.0, %v1552
  %v1634 = vsub.f32 1.0, %v1554
  %v1635 = vsub.f32 1.0, %v1556
  %v1636 = vsub.f32 1.0, %v1558
  %v1637 = vsub.f32 1.0, %v1560
  %v1638 = vsub.f32 1.0, %v1562
  %v1639 = vsub.f32 1.0, %v1564
  %v1640 = vsub.f32 1.0, %v1566
  %v1641 = vsub.f32 1.0, %v1568
  %v1642 = vsub.f32 1.0, %v1570
  %v1643 = vsub.f32 1.0, %v1572
  %v1644 = vsub.f32 1.0, %v1574
  %v1645 = vsub.f32 1.0, %v1576
  %v1646 = vsub.f32 1.0, %v1578
  %v1647 = vsub.f32 1.0, %v1580
  %v1648 = vsub.f32 1.0, %v1582
  %v1649 = vsub.f32 1.0, %v1584
  %v1650 = vsub.f32 1.0, %v1586
  %v1651 = vsub.f32 1.0, %v1588
  %v1652 = vmul.f32 %v1589, %v1589
  %v1653 = vmul.f32 %v1590, %v1590
  %v1654 = vmul.f32 %v1591, %v1591
  %v1655 = vmul.f32 %v1592, %v1592
  %v1656 = vmul.f32 %v1593, %v1593
  %v1657 = vmul.f32 %v1594, %v1594
  %v1658 = vmul.f32 %v1595, %v1595
  %v1659 = vmul.f32 %v1596, %v1596
  %v1660 = vmul.f32 %v1597, %v1597
  %v1661 = vmul.f32 %v1598, %v1598
  %v1662 = vmul.f32 %v1599, %v1599
  %v1663 = vmul.f32 %v1600, %v1600
  %v1664 = vmul.f32 %v1601, %v1601
  %v1665 = vmul.f32 %v1602, %v1602
  %v1666 = vmul.f32 %v1603, %v1603
  %v1667 = vmul.f32 %v1604, %v1604
  %v1668 = vmul.f32 %v1605, %v1605
  %v1669 = vmul.f32 %v1606, %v1606
  %v1670 = vmul.f32 %v1607, %v1607
  %v1671 = vmul.f32 %v1608, %v1608
  %v1672 = vmul.f32 %v1609, %v1609
  %v1673 = vmul.f32 %v1610, %v1610
  %v1674 = vmul.f32 %v1611, %v1611
  %v1675 = vmul.f32 %v1612, %v1612
  %v1676 = vmul.f32 %v1613, %v1613
  %v1677 = vmul.f32 %v1614, %v1614
  %v1678 = vmul.f32 %v1615, %v1615
  %v1679 = vmul.f32 %v1616, %v1616
  %v1680 = vmul.f32 %v1617, %v1617
  %v1681 = vmul.f32 %v1618, %v1618
  %v1682 = vmul.f32 %v1619, %v1619
  %v1683 = vmul.f32 %v1620, %v1620
  %v1684 = vmul.f32 %v1621, %v1621
  %v1685 = vmul.f32 %v1622, %v1622
  %v1686 = vmul.f32 %v1623, %v1623
  %v1687 = vmul.f32 %v1624, %v1624
  %v1688 = vmul.f32 %v1625, %v1625
  %v1689 = vmul.f32 %v1626, %v1626
  %v1690 = vmul.f32 %v1627, %v1627
  %v1691 = vmul.f32 %v1628, %v1628
  %v1692 = vmul.f32 %v1629, %v1629
  %v1693 = vmul.f32 %v1630, %v1630
  %v1694 = vmul.f32 %v1631, %v1631
  %v1695 = vmul.f32 %v1632, %v1632
  %v1696 = vmul.f32 %v1633, %v1633
  %v1697 = vmul.f32 %v1634, %v1634
  %v1698 = vmul.f32 %v1635, %v1635
  %v1699 = vmul.f32 %v1636, %v1636
  %v1700 = vmul.f32 %v1637, %v1637
  %v1701 = vmul.f32 %v1638, %v1638
  %v1702 = vmul.f32 %v1639, %v1639
  %v1703 = vmul.f32 %v1640, %v1640
  %v1704 = vmul.f32 %v1641, %v1641
  %v1705 = vmul.f32 %v1642, %v1642
  %v1706 = vmul.f32 %v1643, %v1643
  %v1707 = vmul.f32 %v1644, %v1644
  %v1708 = vmul.f32 %v1645, %v1645
  %v1709 = vmul.f32 %v1646, %v1646
  %v1710 = vmul.f32 %v1647, %v1647
  %v1711 = vmul.f32 %v1648, %v1648
  %v1712 = vmul.f32 %v1649, %v1649
  %v1713 = vmul.f32 %v1650, %v1650
  %v1714 = vmul.f32 %v1651, %v1651
  %v1715 = vmul.f32 %v1652, %v1400
  %v1716 = vmul.f32 %v1653, %v1401
  %v1717 = vmul.f32 %v1654, %v1402
  %v1718 = vmul.f32 %v1655, %v1403
  %v1719 = vmul.f32 %v1656, %v1404
  %v1720 = vmul.f32 %v1657, %v1405
  %v1721 = vmul.f32 %v1658, %v1406
  %v1722 = vmul.f32 %v1659, %v1407
  %v1723 = vmul.f32 %v1660, %v1408
  %v1724 = vmul.f32 %v1661, %v1409
  %v1725 = vmul.f32 %v1662, %v1410
  %v1726 = vmul.f32 %v1663, %v1411
  %v1727 = vmul.f32 %v1664, %v1412
  %v1728 = vmul.f32 %v1665, %v1413
  %v1729 = vmul.f32 %v1666, %v1414
  %v1730 = vmul.f32 %v1667, %v1415
  %v1731 = vmul.f32 %v1668, %v1416
  %v1732 = vmul.f32 %v1669, %v1417
  %v1733 = vmul.f32 %v1670, %v1418
  %v1734 = vmul.f32 %v1671, %v1419
  %v1735 = vmul.f32 %v1672, %v1420
  %v1736 = vmul.f32 %v1673, %v1421
  %v1737 = vmul.f32 %v1674, %v1422
  %v1738 = vmul.f32 %v1675, %v1423
  %v1739 = vmul.f32 %v1676, %v1424
  %v1740 = vmul.f32 %v1677, %v1425
  %v1741 = vmul.f32 %v1678, %v1426
  %v1742 = vmul.f32 %v1679, %v1427
  %v1743 = vmul.f32 %v1680, %v1428
  %v1744 = vmul.f32 %v1681, %v1429
  %v1745 = vmul.f32 %v1682, %v1430
  %v1746 = vmul.f32 %v1683, %v1431
  %v1747 = vmul.f32 %v1684, %v1432
  %v1748 = vmul.f32 %v1685, %v1433
  %v1749 = vmul.f32 %v1686, %v1434
  %v1750 = vmul.f32 %v1687, %v1435
  %v1751 = vmul.f32 %v1688, %v1436
  %v1752 = vmul.f32 %v1689, %v1437
  %v1753 = vmul.f32 %v1690, %v1438
  %v1754 = vmul.f32 %v1691, %v1439
  %v1755 = vmul.f32 %v1692, %v1440
  %v1756 = vmul.f32 %v1693, %v1441
  %v1757 = vmul.f32 %v1694, %v1442
  %v1758 = vmul.f32 %v1695, %v1443
  %v1759 = vmul.f32 %v1696, %v1444
  %v1760 = vmul.f32 %v1697, %v1445
  %v1761 = vmul.f32 %v1698, %v1446
  %v1762 = vmul.f32 %v1699, %v1447
  %v1763 = vmul.f32 %v1700, %v1448
  %v1764 = vmul.f32 %v1701, %v1449
  %v1765 = vmul.f32 %v1702, %v1450
  %v1766 = vmul.f32 %v1703, %v1451
  %v1767 = vmul.f32 %v1704, %v1452
  %v1768 = vmul.f32 %v1705, %v1453
  %v1769 = vmul.f32 %v1706, %v1454
  %v1770 = vmul.f32 %v1707, %v1455
  %v1771 = vmul.f32 %v1708, %v1456
  %v1772 = vmul.f32 %v1709, %v1457
  %v1773 = vmul.f32 %v1710, %v1458
  %v1774 = vmul.f32 %v1711, %v1459
  %v1775 = vmul.f32 %v1712, %v1460
  %v1776 = vmul.f32 %v1713, %v1461
  %v1777 = vmul.f32 %v1714, %v1462
  %v1778 = vsub.f32 0.0, %v1715
  %v1779 = vsub.f32 0.0, %v1716
  %v1780 = vsub.f32 0.0, %v1717
  %v1781 = vsub.f32 0.0, %v1718
  %v1782 = vsub.f32 0.0, %v1719
  %v1783 = vsub.f32 0.0, %v1720
  %v1784 = vsub.f32 0.0, %v1721
  %v1785 = vsub.f32 0.0, %v1722
  %v1786 = vsub.f32 0.0, %v1723
  %v1787 = vsub.f32 0.0, %v1724
  %v1788 = vsub.f32 0.0, %v1725
  %v1789 = vsub.f32 0.0, %v1726
  %v1790 = vsub.f32 0.0, %v1727
  %v1791 = vsub.f32 0.0, %v1728
  %v1792 = vsub.f32 0.0, %v1729
  %v1793 = vsub.f32 0.0, %v1730
  %v1794 = vsub.f32 0.0, %v1731
  %v1795 = vsub.f32 0.0, %v1732
  %v1796 = vsub.f32 0.0, %v1733
  %v1797 = vsub.f32 0.0, %v1734
  %v1798 = vsub.f32 0.0, %v1735
  %v1799 = vsub.f32 0.0, %v1736
  %v1800 = vsub.f32 0.0, %v1737
  %v1801 = vsub.f32 0.0, %v1738
  %v1802 = vsub.f32 0.0, %v1739
  %v1803 = vsub.f32 0.0, %v1740
  %v1804 = vsub.f32 0.0, %v1741
  %v1805 = vsub.f32 0.0, %v1742
  %v1806 = vsub.f32 0.0, %v1743
  %v1807 = vsub.f32 0.0, %v1744
  %v1808 = vsub.f32 0.0, %v1745
  %v1809 = vsub.f32 0.0, %v1746
  %v1810 = vsub.f32 0.0, %v1747
  %v1811 = vsub.f32 0.0, %v1748
  %v1812 = vsub.f32 0.0, %v1749
  %v1813 = vsub.f32 0.0, %v1750
  %v1814 = vsub.f32 0.0, %v1751
  %v1815 = vsub.f32 0.0, %v1752
  %v1816 = vsub.f32 0.0, %v1753
  %v1817 = vsub.f32 0.0, %v1754
  %v1818 = vsub.f32 0.0, %v1755
  %v1819 = vsub.f32 0.0, %v1756
  %v1820 = vsub.f32 0.0, %v1757
  %v1821 = vsub.f32 0.0, %v1758
  %v1822 = vsub.f32 0.0, %v1759
  %v1823 = vsub.f32 0.0, %v1760
  %v1824 = vsub.f32 0.0, %v1761
  %v1825 = vsub.f32 0.0, %v1762
  %v1826 = vsub.f32 0.0, %v1763
  %v1827 = vsub.f32 0.0, %v1764
  %v1828 = vsub.f32 0.0, %v1765
  %v1829 = vsub.f32 0.0, %v1766
  %v1830 = vsub.f32 0.0, %v1767
  %v1831 = vsub.f32 0.0, %v1768
  %v1832 = vsub.f32 0.0, %v1769
  %v1833 = vsub.f32 0.0, %v1770
  %v1834 = vsub.f32 0.0, %v1771
  %v1835 = vsub.f32 0.0, %v1772
  %v1836 = vsub.f32 0.0, %v1773
  %v1837 = vsub.f32 0.0, %v1774
  %v1838 = vsub.f32 0.0, %v1775
  %v1839 = vsub.f32 0.0, %v1776
  %v1840 = vsub.f32 0.0, %v1777
  %vm1841 = vcmask 7168
  %1842 = vst.msk [vmem:[%s2] sm:$0xff] %vm1841, %v1778
  %1843 = vst.msk [vmem:[%s2 + $0x8] sm:$0xff] %vm1841, %v1779
  %1844 = vst.msk [vmem:[%s2 + $0x10] sm:$0xff] %vm1841, %v1780
  %1845 = vst.msk [vmem:[%s2 + $0x18] sm:$0xff] %vm1841, %v1781
  %1846 = vst.msk [vmem:[%s2 + $0x20] sm:$0xff] %vm1841, %v1782
  %1847 = vst.msk [vmem:[%s2 + $0x28] sm:$0xff] %vm1841, %v1783
  %1848 = vst.msk [vmem:[%s2 + $0x30] sm:$0xff] %vm1841, %v1784
  %1849 = vst.msk [vmem:[%s2 + $0x38] sm:$0xff] %vm1841, %v1785
  %1850 = vst.msk [vmem:[%s2 + $0x40] sm:$0xff] %vm1841, %v1786
  %1851 = vst.msk [vmem:[%s2 + $0x48] sm:$0xff] %vm1841, %v1787
  %1852 = vst.msk [vmem:[%s2 + $0x50] sm:$0xff] %vm1841, %v1788
  %1853 = vst.msk [vmem:[%s2 + $0x58] sm:$0xff] %vm1841, %v1789
  %1854 = vst.msk [vmem:[%s2 + $0x60] sm:$0xff] %vm1841, %v1790
  %1855 = vst.msk [vmem:[%s2 + $0x68] sm:$0xff] %vm1841, %v1791
  %1856 = vst.msk [vmem:[%s2 + $0x70] sm:$0xff] %vm1841, %v1792
  %1857 = vst.msk [vmem:[%s2 + $0x78] sm:$0xff] %vm1841, %v1793
  %1858 = vst.msk [vmem:[%s2 + $0x80] sm:$0xff] %vm1841, %v1794
  %1859 = vst.msk [vmem:[%s2 + $0x88] sm:$0xff] %vm1841, %v1795
  %1860 = vst.msk [vmem:[%s2 + $0x90] sm:$0xff] %vm1841, %v1796
  %1861 = vst.msk [vmem:[%s2 + $0x98] sm:$0xff] %vm1841, %v1797
  %1862 = vst.msk [vmem:[%s2 + $0xa0] sm:$0xff] %vm1841, %v1798
  %1863 = vst.msk [vmem:[%s2 + $0xa8] sm:$0xff] %vm1841, %v1799
  %1864 = vst.msk [vmem:[%s2 + $0xb0] sm:$0xff] %vm1841, %v1800
  %1865 = vst.msk [vmem:[%s2 + $0xb8] sm:$0xff] %vm1841, %v1801
  %1866 = vst.msk [vmem:[%s2 + $0xc0] sm:$0xff] %vm1841, %v1802
  %1867 = vst.msk [vmem:[%s2 + $0xc8] sm:$0xff] %vm1841, %v1803
  %1868 = vst.msk [vmem:[%s2 + $0xd0] sm:$0xff] %vm1841, %v1804
  %1869 = vst.msk [vmem:[%s2 + $0xd8] sm:$0xff] %vm1841, %v1805
  %1870 = vst.msk [vmem:[%s2 + $0xe0] sm:$0xff] %vm1841, %v1806
  %1871 = vst.msk [vmem:[%s2 + $0xe8] sm:$0xff] %vm1841, %v1807
  %1872 = vst.msk [vmem:[%s2 + $0xf0] sm:$0xff] %vm1841, %v1808
  %1873 = vst.msk [vmem:[%s2 + $0xf8] sm:$0xff] %vm1841, %v1809
  %1874 = vst.msk [vmem:[%s2 + $0x100] sm:$0xff] %vm1841, %v1810
  %1875 = vst.msk [vmem:[%s2 + $0x108] sm:$0xff] %vm1841, %v1811
  %1876 = vst.msk [vmem:[%s2 + $0x110] sm:$0xff] %vm1841, %v1812
  %1877 = vst.msk [vmem:[%s2 + $0x118] sm:$0xff] %vm1841, %v1813
  %1878 = vst.msk [vmem:[%s2 + $0x120] sm:$0xff] %vm1841, %v1814
  %1879 = vst.msk [vmem:[%s2 + $0x128] sm:$0xff] %vm1841, %v1815
  %1880 = vst.msk [vmem:[%s2 + $0x130] sm:$0xff] %vm1841, %v1816
  %1881 = vst.msk [vmem:[%s2 + $0x138] sm:$0xff] %vm1841, %v1817
  %1882 = vst.msk [vmem:[%s2 + $0x140] sm:$0xff] %vm1841, %v1818
  %1883 = vst.msk [vmem:[%s2 + $0x148] sm:$0xff] %vm1841, %v1819
  %1884 = vst.msk [vmem:[%s2 + $0x150] sm:$0xff] %vm1841, %v1820
  %1885 = vst.msk [vmem:[%s2 + $0x158] sm:$0xff] %vm1841, %v1821
  %1886 = vst.msk [vmem:[%s2 + $0x160] sm:$0xff] %vm1841, %v1822
  %1887 = vst.msk [vmem:[%s2 + $0x168] sm:$0xff] %vm1841, %v1823
  %1888 = vst.msk [vmem:[%s2 + $0x170] sm:$0xff] %vm1841, %v1824
  %1889 = vst.msk [vmem:[%s2 + $0x178] sm:$0xff] %vm1841, %v1825
  %1890 = vst.msk [vmem:[%s2 + $0x180] sm:$0xff] %vm1841, %v1826
  %1891 = vst.msk [vmem:[%s2 + $0x188] sm:$0xff] %vm1841, %v1827
  %1892 = vst.msk [vmem:[%s2 + $0x190] sm:$0xff] %vm1841, %v1828
  %1893 = vst.msk [vmem:[%s2 + $0x198] sm:$0xff] %vm1841, %v1829
  %1894 = vst.msk [vmem:[%s2 + $0x1a0] sm:$0xff] %vm1841, %v1830
  %1895 = vst.msk [vmem:[%s2 + $0x1a8] sm:$0xff] %vm1841, %v1831
  %1896 = vst.msk [vmem:[%s2 + $0x1b0] sm:$0xff] %vm1841, %v1832
  %1897 = vst.msk [vmem:[%s2 + $0x1b8] sm:$0xff] %vm1841, %v1833
  %1898 = vst.msk [vmem:[%s2 + $0x1c0] sm:$0xff] %vm1841, %v1834
  %1899 = vst.msk [vmem:[%s2 + $0x1c8] sm:$0xff] %vm1841, %v1835
  %1900 = vst.msk [vmem:[%s2 + $0x1d0] sm:$0xff] %vm1841, %v1836
  %1901 = vst.msk [vmem:[%s2 + $0x1d8] sm:$0xff] %vm1841, %v1837
  %1902 = vst.msk [vmem:[%s2 + $0x1e0] sm:$0xff] %vm1841, %v1838
  %1903 = vst.msk [vmem:[%s2 + $0x1e8] sm:$0xff] %vm1841, %v1839
  %1904 = vst.msk [vmem:[%s2 + $0x1f0] sm:$0xff] %vm1841, %v1840
  // Predicated region
  $region10: #{tpu_custom_call.1} parent=0 // pred_check
    _
  $region11: #{tpu_custom_call.1} parent=0 // pred_check_branch
    %1906 = sbr.rel (0) target = $region13
  $region12: #{tpu_custom_call.1} parent=0 // pred_region
    _
  $region13: #{tpu_custom_call.1} parent=0 // pred_fallthru
    _
  // Predicated region
  $region14: #{tpu_custom_call.1} parent=0 // pred_check
    _
  $region15: #{tpu_custom_call.1} parent=0 // pred_check_branch
    %1908 = sbr.rel (0) target = $region17
  $region16: #{tpu_custom_call.1} parent=0 // pred_region
    _
  $region17: #{tpu_custom_call.1} parent=0 // pred_fallthru
    _

</llo_original>
